<compile_context>
chip_gen: v7x
topology: tpu7x:2x2x1
jax: 0.10.0
libtpu: 0.0.40
codegen_flags: <defaults>
</compile_context>

<pallas_src>
import numpy as np
import jax
import jax.numpy as jnp
from jax.experimental import pallas as pl
from jax.experimental.pallas import tpu as pltpu


def _pick_batch_tile(n):
    """Batch tile: multiple of 8, at most 64, chosen to minimize padded work."""
    n = max(int(n), 1)
    n_tiles = (n + 63) // 64
    per_tile = (n + n_tiles - 1) // n_tiles
    return ((per_tile + 7) // 8) * 8


# ----------------------------- fused kernel ----------------------------------------------------------

def _lenet5_kernel(xw_ref, m1_ref, b1_ref, m2_ref, b2_ref,
                   f1_ref, fb1_ref, w2_ref, fb2_ref, w3_ref, fb3_ref, o_ref):
    f32 = jnp.float32
    tb = xw_ref.shape[1]

    # ---- conv1 (5x5, pad=2) + bias + ReLU + 2x2 max-pool: ONE MXU GEMM ------------------------------
    # lhs rows = (pooled row i, image t); K = 6 padded-input rows x 32 cols = 192.  The four pool
    # phases (r, s) live in the packed weight at lane-aligned column blocks [128*p, 128*p + 84).
    lhs1 = xw_ref[...].reshape(14 * tb, 192)
    z1 = jnp.dot(lhs1, m1_ref[...], preferred_element_type=f32)          # (14*tb, 512)
    p1_pre = jnp.maximum(jnp.maximum(z1[:, 0:84], z1[:, 128:212]),
                         jnp.maximum(z1[:, 256:340], z1[:, 384:468]))
    p1 = jnp.maximum(p1_pre + b1_ref[...], 0.0)                          # (14*tb, 84): rows (i,t), cols (j,c)
    p1_q = p1.reshape(7, 2, tb, 84)                                      # [a, ph, t, (j,c)]; p1 row i = 2a+ph

    # ---- conv2 (5x5, valid) + bias + ReLU + 2x2 max-pool: 10 GEMMs ----------------------------------
    # Row pool-phase r and kernel row di select the lhs slice; both column pool-phases s are packed
    # into one N=208 weight at lane-aligned blocks [0,80) and [128,208).
    p2_pre = None
    for r in (0, 1):
        acc = None
        for di in range(5):
            q = r + di
            lhs = p1_q[q // 2:q // 2 + 5, q % 2, :, :].reshape(5 * tb, 84)
            d = jnp.dot(lhs, m2_ref[di, :, :], preferred_element_type=f32)   # (5*tb, 208)
            acc = d if acc is None else acc + d
        m = jnp.maximum(acc[:, 0:80], acc[:, 128:208])
        p2_pre = m if p2_pre is None else jnp.maximum(p2_pre, m)
    p2 = jnp.maximum(p2_pre + b2_ref[...], 0.0)                          # (5*tb, 80): rows (i2,t), cols (j2,co)
    p2_r = p2.reshape(5, tb, 80)

    # ---- fc1 -> relu -> fc2 -> relu -> fc3 ----------------------------------------------------------
    h = jnp.dot(p2_r[0], f1_ref[0, :, :], preferred_element_type=f32)
    for i2 in range(1, 5):
        h = h + jnp.dot(p2_r[i2], f1_ref[i2, :, :], preferred_element_type=f32)
    h = jnp.maximum(h + fb1_ref[...], 0.0)                               # (tb, 120)
    h = jnp.maximum(jnp.dot(h, w2_ref[...], preferred_element_type=f32) + fb2_ref[...], 0.0)
    o_ref[...] = jnp.dot(h, w3_ref[...], preferred_element_type=f32) + fb3_ref[...]


# ----------------------------- wrapper ----------------------------------------------------------------

def lenet5_forward(x_nchw, kp):
    N = x_nchw.shape[0]
    TB = _pick_batch_tile(N)
    n_tiles = (N + TB - 1) // TB
    Np = n_tiles * TB

    # Input-only preprocessing (cheap plain JAX): pad to 32x32, build 6-row windows (stride 2), and
    # put the batch on the sublane axis.
    x = x_nchw.reshape(N, 28, 28).astype(jnp.float32)
    x = jnp.pad(x, ((0, Np - N), (2, 2), (2, 2)))                        # (Np, 32, 32)
    xw = jnp.stack([x[:, u:u + 28:2, :] for u in range(6)], axis=2)      # (Np, 14, 6, 32)
    xw = xw.transpose(1, 0, 2, 3).reshape(14, Np, 192)                   # xw[i, n, u*32+w] = x_pad[n, 2i+u, w]

    flops_tile = (2 * 14 * TB * 192 * 512 + 10 * 2 * 5 * TB * 84 * 208
                  + 5 * 2 * TB * 80 * 120 + 2 * TB * 120 * 84 + 2 * TB * 84 * 27)
    bytes_w = 4 * (192 * 512 + 84 + 5 * 84 * 208 + 80
                   + 5 * 80 * 120 + 120 + 120 * 84 + 84 + 84 * 27 + 27)
    cost = pl.CostEstimate(flops=n_tiles * flops_tile, transcendentals=0,
                           bytes_accessed=4 * (14 * Np * 192 + Np * 27) + bytes_w)

    out = pl.pallas_call(
        _lenet5_kernel,
        grid=(n_tiles,),
        in_specs=[
            pl.BlockSpec((14, TB, 192), lambda b: (0, b, 0)),   # input row-windows (changes per step)
            pl.BlockSpec((192, 512), lambda b: (0, 0)),         # conv1 packed weights (VMEM-resident)
            pl.BlockSpec((1, 84), lambda b: (0, 0)),
            pl.BlockSpec((5, 84, 208), lambda b: (0, 0, 0)),    # conv2 packed weights (VMEM-resident)
            pl.BlockSpec((1, 80), lambda b: (0, 0)),
            pl.BlockSpec((5, 80, 120), lambda b: (0, 0, 0)),    # fc1 (row-permuted for layout)
            pl.BlockSpec((1, 120), lambda b: (0, 0)),
            pl.BlockSpec((120, 84), lambda b: (0, 0)),          # fc2
            pl.BlockSpec((1, 84), lambda b: (0, 0)),
            pl.BlockSpec((84, 27), lambda b: (0, 0)),           # fc3
            pl.BlockSpec((1, 27), lambda b: (0, 0)),
        ],
        out_specs=pl.BlockSpec((TB, 27), lambda b: (b, 0)),
        out_shape=jax.ShapeDtypeStruct((Np, 27), jnp.float32),
        compiler_params=pltpu.CompilerParams(
            dimension_semantics=("parallel",),
            vmem_limit_bytes=32 * 1024 * 1024,
        ),
        cost_estimate=cost,
    )(xw, kp["m1"], kp["b1"], kp["m2"], kp["b2"],
      kp["f1"], kp["fb1"], kp["w2fc"], kp["fb2"], kp["w3fc"], kp["fb3"])
    return out[:N]


# ----------------------------- parameters (torch layout -> kernel layout) ------------------------------

def init_params(key):
    ks = jax.random.split(key, 10)

    def rnd(k, shape, scale):
        return scale * jax.random.normal(k, shape, jnp.float32)

    return {
        "conv1_w": rnd(ks[0], (6, 1, 5, 5), 0.2),    # torch Conv2d layout (Cout, Cin, KH, KW)
        "conv1_b": rnd(ks[1], (6,), 0.1),
        "conv2_w": rnd(ks[2], (16, 6, 5, 5), 0.1),
        "conv2_b": rnd(ks[3], (16,), 0.1),
        "fc1_w": rnd(ks[4], (120, 400), 0.05),       # torch Linear layout (out, in)
        "fc1_b": rnd(ks[5], (120,), 0.05),
        "fc2_w": rnd(ks[6], (84, 120), 0.05),
        "fc2_b": rnd(ks[7], (84,), 0.05),
        "fc3_w": rnd(ks[8], (27, 84), 0.05),
        "fc3_b": rnd(ks[9], (27,), 0.05),
    }


def pack_params(p):
    W1 = np.asarray(p["conv1_w"], np.float32)        # (6, 1, 5, 5)
    W2 = np.asarray(p["conv2_w"], np.float32)        # (16, 6, 5, 5)
    fc1_w = np.asarray(p["fc1_w"], np.float32)       # (120, 400)

    # conv1: fold the 5x5 stencil, zero-padding and all four 2x2 pool phases into one (192, 512)
    # matrix.  Row u*32+w multiplies x_pad[n, 2i+u, w]; column 128*(2r+s) + (j*6+c) is the
    # pre-activation of channel c at conv output (2i+r, 2j+s).
    m1 = np.zeros((6, 32, 4, 128), np.float32)
    for r in range(2):
        for s in range(2):
            ph = 2 * r + s
            for di in range(5):
                for j in range(14):
                    for dj in range(5):
                        m1[r + di, 2 * j + s + dj, ph, j * 6:(j + 1) * 6] = W1[:, 0, di, dj]
    m1 = m1.reshape(192, 512)

    # conv2: per kernel-row di, fold the channel/width stencil and BOTH column pool phases into a
    # (84, 208) matrix; s=0 output block at lanes [0,80), s=1 at lane-aligned [128,208).
    m2 = np.zeros((5, 84, 208), np.float32)
    for di in range(5):
        for s in range(2):
            for j2 in range(5):
                for dj in range(5):
                    J = 2 * j2 + s + dj
                    for ci in range(6):
                        m2[di, J * 6 + ci, 128 * s + j2 * 16:128 * s + (j2 + 1) * 16] = W2[:, ci, di, dj]

    # fc1: absorb PyTorch's (c, h, w) flatten order vs our (i2, (j2, co)) activation layout.
    f1 = np.transpose(fc1_w.reshape(120, 16, 5, 5), (2, 3, 1, 0)).reshape(5, 80, 120)

    return {
        "m1": jnp.asarray(m1),
        "b1": jnp.asarray(np.tile(np.asarray(p["conv1_b"], np.float32), 14).reshape(1, 84)),
        "m2": jnp.asarray(m2),
        "b2": jnp.asarray(np.tile(np.asarray(p["conv2_b"], np.float32), 5).reshape(1, 80)),
        "f1": jnp.asarray(f1),
        "fb1": jnp.asarray(p["fc1_b"]).reshape(1, 120),
        "w2fc": jnp.asarray(np.asarray(p["fc2_w"], np.float32).T),
        "fb2": jnp.asarray(p["fc2_b"]).reshape(1, 84),
        "w3fc": jnp.asarray(np.asarray(p["fc3_w"], np.float32).T),
        "fb3": jnp.asarray(p["fc3_b"]).reshape(1, 27),
    }


# ----------------------------- pure-JAX reference (for in-script validation) ---------------------------

def _reference(x_nchw, p):
    dn = ("NCHW", "OIHW", "NCHW")
    y = jax.lax.conv_general_dilated(x_nchw, p["conv1_w"], (1, 1), ((2, 2), (2, 2)),
                                     dimension_numbers=dn)
    y = jax.nn.relu(y + p["conv1_b"][None, :, None, None])
    y = jax.lax.reduce_window(y, -jnp.inf, jax.lax.max, (1, 1, 2, 2), (1, 1, 2, 2), "VALID")
    y = jax.lax.conv_general_dilated(y, p["conv2_w"], (1, 1), "VALID", dimension_numbers=dn)
    y = jax.nn.relu(y + p["conv2_b"][None, :, None, None])
    y = jax.lax.reduce_window(y, -jnp.inf, jax.lax.max, (1, 1, 2, 2), (1, 1, 2, 2), "VALID")
    y = y.reshape(y.shape[0], -1)                                        # torch .view: (c, h, w) flatten
    y = jax.nn.relu(y @ p["fc1_w"].T + p["fc1_b"])
    y = jax.nn.relu(y @ p["fc2_w"].T + p["fc2_b"])
    return y @ p["fc3_w"].T + p["fc3_b"]


if __name__ == "__main__":
    key = jax.random.PRNGKey(0)
    k_param, k_x = jax.random.split(key)
    raw = init_params(k_param)
    params = pack_params(raw)
    x = jax.random.normal(k_x, (2, 1, 28, 28), jnp.float32)  # NCHW, as the PyTorch module expects

    fwd = jax.jit(lenet5_forward)
    out = jax.block_until_ready(fwd(x, params))
    assert out.shape == (2, 27) and out.dtype == jnp.float32

    with jax.default_matmul_precision("highest"):
        ref = jax.block_until_ready(_reference(x, raw))
    assert bool(jnp.all(jnp.isfinite(out)))
    np.testing.assert_allclose(np.asarray(out), np.asarray(ref), rtol=1e-3, atol=1e-3)
    print("KERNEL_OK")
</pallas_src>

<mosaic_0001>
module attributes {stable_mosaic.version = 11 : i64} {
  func.func @_lenet5_kernel(%arg0: i32, %arg1: memref<14x8x192xf32, #tpu.memory_space<vmem>>, %arg2: memref<192x512xf32, #tpu.memory_space<vmem>>, %arg3: memref<1x84xf32, #tpu.memory_space<vmem>>, %arg4: memref<5x84x208xf32, #tpu.memory_space<vmem>>, %arg5: memref<1x80xf32, #tpu.memory_space<vmem>>, %arg6: memref<5x80x120xf32, #tpu.memory_space<vmem>>, %arg7: memref<1x120xf32, #tpu.memory_space<vmem>>, %arg8: memref<120x84xf32, #tpu.memory_space<vmem>>, %arg9: memref<1x84xf32, #tpu.memory_space<vmem>>, %arg10: memref<84x27xf32, #tpu.memory_space<vmem>>, %arg11: memref<1x27xf32, #tpu.memory_space<vmem>>, %arg12: memref<8x27xf32, #tpu.memory_space<vmem>>) attributes {dimension_semantics = [#tpu.dimension_semantics<parallel>], iteration_bounds = array<i64: 1>, scalar_prefetch = 0 : i64, scratch_operands = 0 : i64, tpu.core_type = #tpu.core_type<tc>, window_params = [{transform_indices = @transform_0, window_bounds = array<i64: 14, 8, 192>}, {pipeline_mode = #tpu.pipeline_mode<synchronous>, transform_indices = @transform_1, window_bounds = array<i64: 192, 512>}, {pipeline_mode = #tpu.pipeline_mode<synchronous>, transform_indices = @transform_2, window_bounds = array<i64: 1, 84>}, {pipeline_mode = #tpu.pipeline_mode<synchronous>, transform_indices = @transform_3, window_bounds = array<i64: 5, 84, 208>}, {pipeline_mode = #tpu.pipeline_mode<synchronous>, transform_indices = @transform_4, window_bounds = array<i64: 1, 80>}, {pipeline_mode = #tpu.pipeline_mode<synchronous>, transform_indices = @transform_5, window_bounds = array<i64: 5, 80, 120>}, {pipeline_mode = #tpu.pipeline_mode<synchronous>, transform_indices = @transform_6, window_bounds = array<i64: 1, 120>}, {pipeline_mode = #tpu.pipeline_mode<synchronous>, transform_indices = @transform_7, window_bounds = array<i64: 120, 84>}, {pipeline_mode = #tpu.pipeline_mode<synchronous>, transform_indices = @transform_8, window_bounds = array<i64: 1, 84>}, {pipeline_mode = #tpu.pipeline_mode<synchronous>, transform_indices = @transform_9, window_bounds = array<i64: 84, 27>}, {pipeline_mode = #tpu.pipeline_mode<synchronous>, transform_indices = @transform_10, window_bounds = array<i64: 1, 27>}, {transform_indices = @transform_11, window_bounds = array<i64: 8, 27>}]} {
    %c0 = arith.constant 0 : index
    %c0_0 = arith.constant 0 : index
    %c0_1 = arith.constant 0 : index
    %0 = vector.load %arg1[%c0, %c0_0, %c0_1] : memref<14x8x192xf32, #tpu.memory_space<vmem>>, vector<14x8x192xf32>
    %1 = vector.shape_cast %0 : vector<14x8x192xf32> to vector<112x192xf32>
    %c0_2 = arith.constant 0 : index
    %c0_3 = arith.constant 0 : index
    %2 = vector.load %arg2[%c0_2, %c0_3] : memref<192x512xf32, #tpu.memory_space<vmem>>, vector<192x512xf32>
    %cst = arith.constant dense<0.000000e+00> : vector<112x512xf32>
    %3 = tpu.matmul %1, %2, %cst {dimension_numbers = #tpu.dot_dimension_numbers<[1], [0], [0], [1], [0, 0, 1, 1], [], []>} : vector<112x192xf32>, vector<192x512xf32>, vector<112x512xf32> -> vector<112x512xf32>
    %4 = vector.extract_strided_slice %3 {offsets = [0, 0], sizes = [112, 84], strides = [1, 1]} : vector<112x512xf32> to vector<112x84xf32>
    %5 = vector.extract_strided_slice %3 {offsets = [0, 128], sizes = [112, 84], strides = [1, 1]} : vector<112x512xf32> to vector<112x84xf32>
    %6 = arith.maximumf %4, %5 : vector<112x84xf32>
    %7 = vector.extract_strided_slice %3 {offsets = [0, 256], sizes = [112, 84], strides = [1, 1]} : vector<112x512xf32> to vector<112x84xf32>
    %8 = vector.extract_strided_slice %3 {offsets = [0, 384], sizes = [112, 84], strides = [1, 1]} : vector<112x512xf32> to vector<112x84xf32>
    %9 = arith.maximumf %7, %8 : vector<112x84xf32>
    %10 = arith.maximumf %6, %9 : vector<112x84xf32>
    %c0_4 = arith.constant 0 : index
    %c0_5 = arith.constant 0 : index
    %11 = vector.load %arg3[%c0_4, %c0_5] : memref<1x84xf32, #tpu.memory_space<vmem>>, vector<1x84xf32>
    %12 = vector.broadcast %11 : vector<1x84xf32> to vector<112x84xf32>
    %13 = arith.addf %10, %12 : vector<112x84xf32>
    %cst_6 = arith.constant 0.000000e+00 : f32
    %14 = vector.broadcast %cst_6 : f32 to vector<112x84xf32>
    %15 = arith.maximumf %13, %14 : vector<112x84xf32>
    %16 = vector.shape_cast %15 : vector<112x84xf32> to vector<7x2x8x84xf32>
    %17 = vector.extract_strided_slice %16 {offsets = [0, 0, 0, 0], sizes = [5, 1, 8, 84], strides = [1, 1, 1, 1]} : vector<7x2x8x84xf32> to vector<5x1x8x84xf32>
    %18 = vector.shape_cast %17 : vector<5x1x8x84xf32> to vector<5x8x84xf32>
    %19 = vector.shape_cast %18 : vector<5x8x84xf32> to vector<40x84xf32>
    %c0_7 = arith.constant 0 : index
    %c0_8 = arith.constant 0 : index
    %c0_9 = arith.constant 0 : index
    %20 = vector.load %arg4[%c0_7, %c0_8, %c0_9] : memref<5x84x208xf32, #tpu.memory_space<vmem>>, vector<1x84x208xf32>
    %21 = vector.shape_cast %20 : vector<1x84x208xf32> to vector<84x208xf32>
    %cst_10 = arith.constant dense<0.000000e+00> : vector<40x208xf32>
    %22 = tpu.matmul %19, %21, %cst_10 {dimension_numbers = #tpu.dot_dimension_numbers<[1], [0], [0], [1], [0, 0, 1, 1], [], []>} : vector<40x84xf32>, vector<84x208xf32>, vector<40x208xf32> -> vector<40x208xf32>
    %23 = vector.extract_strided_slice %16 {offsets = [0, 1, 0, 0], sizes = [5, 1, 8, 84], strides = [1, 1, 1, 1]} : vector<7x2x8x84xf32> to vector<5x1x8x84xf32>
    %24 = vector.shape_cast %23 : vector<5x1x8x84xf32> to vector<5x8x84xf32>
    %25 = vector.shape_cast %24 : vector<5x8x84xf32> to vector<40x84xf32>
    %c1 = arith.constant 1 : index
    %c0_11 = arith.constant 0 : index
    %c0_12 = arith.constant 0 : index
    %26 = vector.load %arg4[%c1, %c0_11, %c0_12] : memref<5x84x208xf32, #tpu.memory_space<vmem>>, vector<1x84x208xf32>
    %27 = vector.shape_cast %26 : vector<1x84x208xf32> to vector<84x208xf32>
    %cst_13 = arith.constant dense<0.000000e+00> : vector<40x208xf32>
    %28 = tpu.matmul %25, %27, %cst_13 {dimension_numbers = #tpu.dot_dimension_numbers<[1], [0], [0], [1], [0, 0, 1, 1], [], []>} : vector<40x84xf32>, vector<84x208xf32>, vector<40x208xf32> -> vector<40x208xf32>
    %29 = arith.addf %22, %28 : vector<40x208xf32>
    %30 = vector.extract_strided_slice %16 {offsets = [1, 0, 0, 0], sizes = [5, 1, 8, 84], strides = [1, 1, 1, 1]} : vector<7x2x8x84xf32> to vector<5x1x8x84xf32>
    %31 = vector.shape_cast %30 : vector<5x1x8x84xf32> to vector<5x8x84xf32>
    %32 = vector.shape_cast %31 : vector<5x8x84xf32> to vector<40x84xf32>
    %c2 = arith.constant 2 : index
    %c0_14 = arith.constant 0 : index
    %c0_15 = arith.constant 0 : index
    %33 = vector.load %arg4[%c2, %c0_14, %c0_15] : memref<5x84x208xf32, #tpu.memory_space<vmem>>, vector<1x84x208xf32>
    %34 = vector.shape_cast %33 : vector<1x84x208xf32> to vector<84x208xf32>
    %cst_16 = arith.constant dense<0.000000e+00> : vector<40x208xf32>
    %35 = tpu.matmul %32, %34, %cst_16 {dimension_numbers = #tpu.dot_dimension_numbers<[1], [0], [0], [1], [0, 0, 1, 1], [], []>} : vector<40x84xf32>, vector<84x208xf32>, vector<40x208xf32> -> vector<40x208xf32>
    %36 = arith.addf %29, %35 : vector<40x208xf32>
    %37 = vector.extract_strided_slice %16 {offsets = [1, 1, 0, 0], sizes = [5, 1, 8, 84], strides = [1, 1, 1, 1]} : vector<7x2x8x84xf32> to vector<5x1x8x84xf32>
    %38 = vector.shape_cast %37 : vector<5x1x8x84xf32> to vector<5x8x84xf32>
    %39 = vector.shape_cast %38 : vector<5x8x84xf32> to vector<40x84xf32>
    %c3 = arith.constant 3 : index
    %c0_17 = arith.constant 0 : index
    %c0_18 = arith.constant 0 : index
    %40 = vector.load %arg4[%c3, %c0_17, %c0_18] : memref<5x84x208xf32, #tpu.memory_space<vmem>>, vector<1x84x208xf32>
    %41 = vector.shape_cast %40 : vector<1x84x208xf32> to vector<84x208xf32>
    %cst_19 = arith.constant dense<0.000000e+00> : vector<40x208xf32>
    %42 = tpu.matmul %39, %41, %cst_19 {dimension_numbers = #tpu.dot_dimension_numbers<[1], [0], [0], [1], [0, 0, 1, 1], [], []>} : vector<40x84xf32>, vector<84x208xf32>, vector<40x208xf32> -> vector<40x208xf32>
    %43 = arith.addf %36, %42 : vector<40x208xf32>
    %44 = vector.extract_strided_slice %16 {offsets = [2, 0, 0, 0], sizes = [5, 1, 8, 84], strides = [1, 1, 1, 1]} : vector<7x2x8x84xf32> to vector<5x1x8x84xf32>
    %45 = vector.shape_cast %44 : vector<5x1x8x84xf32> to vector<5x8x84xf32>
    %46 = vector.shape_cast %45 : vector<5x8x84xf32> to vector<40x84xf32>
    %c4 = arith.constant 4 : index
    %c0_20 = arith.constant 0 : index
    %c0_21 = arith.constant 0 : index
    %47 = vector.load %arg4[%c4, %c0_20, %c0_21] : memref<5x84x208xf32, #tpu.memory_space<vmem>>, vector<1x84x208xf32>
    %48 = vector.shape_cast %47 : vector<1x84x208xf32> to vector<84x208xf32>
    %cst_22 = arith.constant dense<0.000000e+00> : vector<40x208xf32>
    %49 = tpu.matmul %46, %48, %cst_22 {dimension_numbers = #tpu.dot_dimension_numbers<[1], [0], [0], [1], [0, 0, 1, 1], [], []>} : vector<40x84xf32>, vector<84x208xf32>, vector<40x208xf32> -> vector<40x208xf32>
    %50 = arith.addf %43, %49 : vector<40x208xf32>
    %51 = vector.extract_strided_slice %50 {offsets = [0, 0], sizes = [40, 80], strides = [1, 1]} : vector<40x208xf32> to vector<40x80xf32>
    %52 = vector.extract_strided_slice %50 {offsets = [0, 128], sizes = [40, 80], strides = [1, 1]} : vector<40x208xf32> to vector<40x80xf32>
    %53 = arith.maximumf %51, %52 : vector<40x80xf32>
    %54 = vector.extract_strided_slice %16 {offsets = [0, 1, 0, 0], sizes = [5, 1, 8, 84], strides = [1, 1, 1, 1]} : vector<7x2x8x84xf32> to vector<5x1x8x84xf32>
    %55 = vector.shape_cast %54 : vector<5x1x8x84xf32> to vector<5x8x84xf32>
    %56 = vector.shape_cast %55 : vector<5x8x84xf32> to vector<40x84xf32>
    %c0_23 = arith.constant 0 : index
    %c0_24 = arith.constant 0 : index
    %c0_25 = arith.constant 0 : index
    %57 = vector.load %arg4[%c0_23, %c0_24, %c0_25] : memref<5x84x208xf32, #tpu.memory_space<vmem>>, vector<1x84x208xf32>
    %58 = vector.shape_cast %57 : vector<1x84x208xf32> to vector<84x208xf32>
    %cst_26 = arith.constant dense<0.000000e+00> : vector<40x208xf32>
    %59 = tpu.matmul %56, %58, %cst_26 {dimension_numbers = #tpu.dot_dimension_numbers<[1], [0], [0], [1], [0, 0, 1, 1], [], []>} : vector<40x84xf32>, vector<84x208xf32>, vector<40x208xf32> -> vector<40x208xf32>
    %60 = vector.extract_strided_slice %16 {offsets = [1, 0, 0, 0], sizes = [5, 1, 8, 84], strides = [1, 1, 1, 1]} : vector<7x2x8x84xf32> to vector<5x1x8x84xf32>
    %61 = vector.shape_cast %60 : vector<5x1x8x84xf32> to vector<5x8x84xf32>
    %62 = vector.shape_cast %61 : vector<5x8x84xf32> to vector<40x84xf32>
    %c1_27 = arith.constant 1 : index
    %c0_28 = arith.constant 0 : index
    %c0_29 = arith.constant 0 : index
    %63 = vector.load %arg4[%c1_27, %c0_28, %c0_29] : memref<5x84x208xf32, #tpu.memory_space<vmem>>, vector<1x84x208xf32>
    %64 = vector.shape_cast %63 : vector<1x84x208xf32> to vector<84x208xf32>
    %cst_30 = arith.constant dense<0.000000e+00> : vector<40x208xf32>
    %65 = tpu.matmul %62, %64, %cst_30 {dimension_numbers = #tpu.dot_dimension_numbers<[1], [0], [0], [1], [0, 0, 1, 1], [], []>} : vector<40x84xf32>, vector<84x208xf32>, vector<40x208xf32> -> vector<40x208xf32>
    %66 = arith.addf %59, %65 : vector<40x208xf32>
    %67 = vector.extract_strided_slice %16 {offsets = [1, 1, 0, 0], sizes = [5, 1, 8, 84], strides = [1, 1, 1, 1]} : vector<7x2x8x84xf32> to vector<5x1x8x84xf32>
    %68 = vector.shape_cast %67 : vector<5x1x8x84xf32> to vector<5x8x84xf32>
    %69 = vector.shape_cast %68 : vector<5x8x84xf32> to vector<40x84xf32>
    %c2_31 = arith.constant 2 : index
    %c0_32 = arith.constant 0 : index
    %c0_33 = arith.constant 0 : index
    %70 = vector.load %arg4[%c2_31, %c0_32, %c0_33] : memref<5x84x208xf32, #tpu.memory_space<vmem>>, vector<1x84x208xf32>
    %71 = vector.shape_cast %70 : vector<1x84x208xf32> to vector<84x208xf32>
    %cst_34 = arith.constant dense<0.000000e+00> : vector<40x208xf32>
    %72 = tpu.matmul %69, %71, %cst_34 {dimension_numbers = #tpu.dot_dimension_numbers<[1], [0], [0], [1], [0, 0, 1, 1], [], []>} : vector<40x84xf32>, vector<84x208xf32>, vector<40x208xf32> -> vector<40x208xf32>
    %73 = arith.addf %66, %72 : vector<40x208xf32>
    %74 = vector.extract_strided_slice %16 {offsets = [2, 0, 0, 0], sizes = [5, 1, 8, 84], strides = [1, 1, 1, 1]} : vector<7x2x8x84xf32> to vector<5x1x8x84xf32>
    %75 = vector.shape_cast %74 : vector<5x1x8x84xf32> to vector<5x8x84xf32>
    %76 = vector.shape_cast %75 : vector<5x8x84xf32> to vector<40x84xf32>
    %c3_35 = arith.constant 3 : index
    %c0_36 = arith.constant 0 : index
    %c0_37 = arith.constant 0 : index
    %77 = vector.load %arg4[%c3_35, %c0_36, %c0_37] : memref<5x84x208xf32, #tpu.memory_space<vmem>>, vector<1x84x208xf32>
    %78 = vector.shape_cast %77 : vector<1x84x208xf32> to vector<84x208xf32>
    %cst_38 = arith.constant dense<0.000000e+00> : vector<40x208xf32>
    %79 = tpu.matmul %76, %78, %cst_38 {dimension_numbers = #tpu.dot_dimension_numbers<[1], [0], [0], [1], [0, 0, 1, 1], [], []>} : vector<40x84xf32>, vector<84x208xf32>, vector<40x208xf32> -> vector<40x208xf32>
    %80 = arith.addf %73, %79 : vector<40x208xf32>
    %81 = vector.extract_strided_slice %16 {offsets = [2, 1, 0, 0], sizes = [5, 1, 8, 84], strides = [1, 1, 1, 1]} : vector<7x2x8x84xf32> to vector<5x1x8x84xf32>
    %82 = vector.shape_cast %81 : vector<5x1x8x84xf32> to vector<5x8x84xf32>
    %83 = vector.shape_cast %82 : vector<5x8x84xf32> to vector<40x84xf32>
    %c4_39 = arith.constant 4 : index
    %c0_40 = arith.constant 0 : index
    %c0_41 = arith.constant 0 : index
    %84 = vector.load %arg4[%c4_39, %c0_40, %c0_41] : memref<5x84x208xf32, #tpu.memory_space<vmem>>, vector<1x84x208xf32>
    %85 = vector.shape_cast %84 : vector<1x84x208xf32> to vector<84x208xf32>
    %cst_42 = arith.constant dense<0.000000e+00> : vector<40x208xf32>
    %86 = tpu.matmul %83, %85, %cst_42 {dimension_numbers = #tpu.dot_dimension_numbers<[1], [0], [0], [1], [0, 0, 1, 1], [], []>} : vector<40x84xf32>, vector<84x208xf32>, vector<40x208xf32> -> vector<40x208xf32>
    %87 = arith.addf %80, %86 : vector<40x208xf32>
    %88 = vector.extract_strided_slice %87 {offsets = [0, 0], sizes = [40, 80], strides = [1, 1]} : vector<40x208xf32> to vector<40x80xf32>
    %89 = vector.extract_strided_slice %87 {offsets = [0, 128], sizes = [40, 80], strides = [1, 1]} : vector<40x208xf32> to vector<40x80xf32>
    %90 = arith.maximumf %88, %89 : vector<40x80xf32>
    %91 = arith.maximumf %53, %90 : vector<40x80xf32>
    %c0_43 = arith.constant 0 : index
    %c0_44 = arith.constant 0 : index
    %92 = vector.load %arg5[%c0_43, %c0_44] : memref<1x80xf32, #tpu.memory_space<vmem>>, vector<1x80xf32>
    %93 = vector.broadcast %92 : vector<1x80xf32> to vector<40x80xf32>
    %94 = arith.addf %91, %93 : vector<40x80xf32>
    %cst_45 = arith.constant 0.000000e+00 : f32
    %95 = vector.broadcast %cst_45 : f32 to vector<40x80xf32>
    %96 = arith.maximumf %94, %95 : vector<40x80xf32>
    %97 = vector.shape_cast %96 : vector<40x80xf32> to vector<5x8x80xf32>
    %98 = vector.extract_strided_slice %97 {offsets = [0, 0, 0], sizes = [1, 8, 80], strides = [1, 1, 1]} : vector<5x8x80xf32> to vector<1x8x80xf32>
    %99 = vector.shape_cast %98 : vector<1x8x80xf32> to vector<8x80xf32>
    %c0_46 = arith.constant 0 : index
    %c0_47 = arith.constant 0 : index
    %c0_48 = arith.constant 0 : index
    %100 = vector.load %arg6[%c0_46, %c0_47, %c0_48] : memref<5x80x120xf32, #tpu.memory_space<vmem>>, vector<1x80x120xf32>
    %101 = vector.shape_cast %100 : vector<1x80x120xf32> to vector<80x120xf32>
    %cst_49 = arith.constant dense<0.000000e+00> : vector<8x120xf32>
    %102 = tpu.matmul %99, %101, %cst_49 {dimension_numbers = #tpu.dot_dimension_numbers<[1], [0], [0], [1], [0, 0, 1, 1], [], []>} : vector<8x80xf32>, vector<80x120xf32>, vector<8x120xf32> -> vector<8x120xf32>
    %103 = vector.extract_strided_slice %97 {offsets = [1, 0, 0], sizes = [1, 8, 80], strides = [1, 1, 1]} : vector<5x8x80xf32> to vector<1x8x80xf32>
    %104 = vector.shape_cast %103 : vector<1x8x80xf32> to vector<8x80xf32>
    %c1_50 = arith.constant 1 : index
    %c0_51 = arith.constant 0 : index
    %c0_52 = arith.constant 0 : index
    %105 = vector.load %arg6[%c1_50, %c0_51, %c0_52] : memref<5x80x120xf32, #tpu.memory_space<vmem>>, vector<1x80x120xf32>
    %106 = vector.shape_cast %105 : vector<1x80x120xf32> to vector<80x120xf32>
    %cst_53 = arith.constant dense<0.000000e+00> : vector<8x120xf32>
    %107 = tpu.matmul %104, %106, %cst_53 {dimension_numbers = #tpu.dot_dimension_numbers<[1], [0], [0], [1], [0, 0, 1, 1], [], []>} : vector<8x80xf32>, vector<80x120xf32>, vector<8x120xf32> -> vector<8x120xf32>
    %108 = arith.addf %102, %107 : vector<8x120xf32>
    %109 = vector.extract_strided_slice %97 {offsets = [2, 0, 0], sizes = [1, 8, 80], strides = [1, 1, 1]} : vector<5x8x80xf32> to vector<1x8x80xf32>
    %110 = vector.shape_cast %109 : vector<1x8x80xf32> to vector<8x80xf32>
    %c2_54 = arith.constant 2 : index
    %c0_55 = arith.constant 0 : index
    %c0_56 = arith.constant 0 : index
    %111 = vector.load %arg6[%c2_54, %c0_55, %c0_56] : memref<5x80x120xf32, #tpu.memory_space<vmem>>, vector<1x80x120xf32>
    %112 = vector.shape_cast %111 : vector<1x80x120xf32> to vector<80x120xf32>
    %cst_57 = arith.constant dense<0.000000e+00> : vector<8x120xf32>
    %113 = tpu.matmul %110, %112, %cst_57 {dimension_numbers = #tpu.dot_dimension_numbers<[1], [0], [0], [1], [0, 0, 1, 1], [], []>} : vector<8x80xf32>, vector<80x120xf32>, vector<8x120xf32> -> vector<8x120xf32>
    %114 = arith.addf %108, %113 : vector<8x120xf32>
    %115 = vector.extract_strided_slice %97 {offsets = [3, 0, 0], sizes = [1, 8, 80], strides = [1, 1, 1]} : vector<5x8x80xf32> to vector<1x8x80xf32>
    %116 = vector.shape_cast %115 : vector<1x8x80xf32> to vector<8x80xf32>
    %c3_58 = arith.constant 3 : index
    %c0_59 = arith.constant 0 : index
    %c0_60 = arith.constant 0 : index
    %117 = vector.load %arg6[%c3_58, %c0_59, %c0_60] : memref<5x80x120xf32, #tpu.memory_space<vmem>>, vector<1x80x120xf32>
    %118 = vector.shape_cast %117 : vector<1x80x120xf32> to vector<80x120xf32>
    %cst_61 = arith.constant dense<0.000000e+00> : vector<8x120xf32>
    %119 = tpu.matmul %116, %118, %cst_61 {dimension_numbers = #tpu.dot_dimension_numbers<[1], [0], [0], [1], [0, 0, 1, 1], [], []>} : vector<8x80xf32>, vector<80x120xf32>, vector<8x120xf32> -> vector<8x120xf32>
    %120 = arith.addf %114, %119 : vector<8x120xf32>
    %121 = vector.extract_strided_slice %97 {offsets = [4, 0, 0], sizes = [1, 8, 80], strides = [1, 1, 1]} : vector<5x8x80xf32> to vector<1x8x80xf32>
    %122 = vector.shape_cast %121 : vector<1x8x80xf32> to vector<8x80xf32>
    %c4_62 = arith.constant 4 : index
    %c0_63 = arith.constant 0 : index
    %c0_64 = arith.constant 0 : index
    %123 = vector.load %arg6[%c4_62, %c0_63, %c0_64] : memref<5x80x120xf32, #tpu.memory_space<vmem>>, vector<1x80x120xf32>
    %124 = vector.shape_cast %123 : vector<1x80x120xf32> to vector<80x120xf32>
    %cst_65 = arith.constant dense<0.000000e+00> : vector<8x120xf32>
    %125 = tpu.matmul %122, %124, %cst_65 {dimension_numbers = #tpu.dot_dimension_numbers<[1], [0], [0], [1], [0, 0, 1, 1], [], []>} : vector<8x80xf32>, vector<80x120xf32>, vector<8x120xf32> -> vector<8x120xf32>
    %126 = arith.addf %120, %125 : vector<8x120xf32>
    %c0_66 = arith.constant 0 : index
    %c0_67 = arith.constant 0 : index
    %127 = vector.load %arg7[%c0_66, %c0_67] : memref<1x120xf32, #tpu.memory_space<vmem>>, vector<1x120xf32>
    %128 = vector.broadcast %127 : vector<1x120xf32> to vector<8x120xf32>
    %129 = arith.addf %126, %128 : vector<8x120xf32>
    %cst_68 = arith.constant 0.000000e+00 : f32
    %130 = vector.broadcast %cst_68 : f32 to vector<8x120xf32>
    %131 = arith.maximumf %129, %130 : vector<8x120xf32>
    %c0_69 = arith.constant 0 : index
    %c0_70 = arith.constant 0 : index
    %132 = vector.load %arg8[%c0_69, %c0_70] : memref<120x84xf32, #tpu.memory_space<vmem>>, vector<120x84xf32>
    %cst_71 = arith.constant dense<0.000000e+00> : vector<8x84xf32>
    %133 = tpu.matmul %131, %132, %cst_71 {dimension_numbers = #tpu.dot_dimension_numbers<[1], [0], [0], [1], [0, 0, 1, 1], [], []>} : vector<8x120xf32>, vector<120x84xf32>, vector<8x84xf32> -> vector<8x84xf32>
    %c0_72 = arith.constant 0 : index
    %c0_73 = arith.constant 0 : index
    %134 = vector.load %arg9[%c0_72, %c0_73] : memref<1x84xf32, #tpu.memory_space<vmem>>, vector<1x84xf32>
    %135 = vector.broadcast %134 : vector<1x84xf32> to vector<8x84xf32>
    %136 = arith.addf %133, %135 : vector<8x84xf32>
    %cst_74 = arith.constant 0.000000e+00 : f32
    %137 = vector.broadcast %cst_74 : f32 to vector<8x84xf32>
    %138 = arith.maximumf %136, %137 : vector<8x84xf32>
    %c0_75 = arith.constant 0 : index
    %c0_76 = arith.constant 0 : index
    %139 = vector.load %arg10[%c0_75, %c0_76] : memref<84x27xf32, #tpu.memory_space<vmem>>, vector<84x27xf32>
    %cst_77 = arith.constant dense<0.000000e+00> : vector<8x27xf32>
    %140 = tpu.matmul %138, %139, %cst_77 {dimension_numbers = #tpu.dot_dimension_numbers<[1], [0], [0], [1], [0, 0, 1, 1], [], []>} : vector<8x84xf32>, vector<84x27xf32>, vector<8x27xf32> -> vector<8x27xf32>
    %c0_78 = arith.constant 0 : index
    %c0_79 = arith.constant 0 : index
    %141 = vector.load %arg11[%c0_78, %c0_79] : memref<1x27xf32, #tpu.memory_space<vmem>>, vector<1x27xf32>
    %142 = vector.broadcast %141 : vector<1x27xf32> to vector<8x27xf32>
    %143 = arith.addf %140, %142 : vector<8x27xf32>
    %c0_80 = arith.constant 0 : index
    %c0_81 = arith.constant 0 : index
    %144 = vector.load %arg12[%c0_80, %c0_81] : memref<8x27xf32, #tpu.memory_space<vmem>>, vector<8x27xf32>
    tpu.vector_store %arg12[%c0_80, %c0_81], %143 {strides = array<i32>} : memref<8x27xf32, #tpu.memory_space<vmem>>, vector<8x27xf32>,
    return
  }
  func.func @transform_0(%arg0: i32) -> (i32, i32, i32) {
    %c0_i32 = arith.constant 0 : i32
    %c0_i32_0 = arith.constant 0 : i32
    %c0_i32_1 = arith.constant 0 : i32
    return %c0_i32, %arg0, %c0_i32_0 : i32, i32, i32
  }
  func.func @transform_1(%arg0: i32) -> (i32, i32) {
    %c0_i32 = arith.constant 0 : i32
    %c0_i32_0 = arith.constant 0 : i32
    %c0_i32_1 = arith.constant 0 : i32
    return %c0_i32, %c0_i32_0 : i32, i32
  }
  func.func @transform_2(%arg0: i32) -> (i32, i32) {
    %c0_i32 = arith.constant 0 : i32
    %c0_i32_0 = arith.constant 0 : i32
    %c0_i32_1 = arith.constant 0 : i32
    return %c0_i32, %c0_i32_0 : i32, i32
  }
  func.func @transform_3(%arg0: i32) -> (i32, i32, i32) {
    %c0_i32 = arith.constant 0 : i32
    %c0_i32_0 = arith.constant 0 : i32
    %c0_i32_1 = arith.constant 0 : i32
    %c0_i32_2 = arith.constant 0 : i32
    return %c0_i32, %c0_i32_0, %c0_i32_1 : i32, i32, i32
  }
  func.func @transform_4(%arg0: i32) -> (i32, i32) {
    %c0_i32 = arith.constant 0 : i32
    %c0_i32_0 = arith.constant 0 : i32
    %c0_i32_1 = arith.constant 0 : i32
    return %c0_i32, %c0_i32_0 : i32, i32
  }
  func.func @transform_5(%arg0: i32) -> (i32, i32, i32) {
    %c0_i32 = arith.constant 0 : i32
    %c0_i32_0 = arith.constant 0 : i32
    %c0_i32_1 = arith.constant 0 : i32
    %c0_i32_2 = arith.constant 0 : i32
    return %c0_i32, %c0_i32_0, %c0_i32_1 : i32, i32, i32
  }
  func.func @transform_6(%arg0: i32) -> (i32, i32) {
    %c0_i32 = arith.constant 0 : i32
    %c0_i32_0 = arith.constant 0 : i32
    %c0_i32_1 = arith.constant 0 : i32
    return %c0_i32, %c0_i32_0 : i32, i32
  }
  func.func @transform_7(%arg0: i32) -> (i32, i32) {
    %c0_i32 = arith.constant 0 : i32
    %c0_i32_0 = arith.constant 0 : i32
    %c0_i32_1 = arith.constant 0 : i32
    return %c0_i32, %c0_i32_0 : i32, i32
  }
  func.func @transform_8(%arg0: i32) -> (i32, i32) {
    %c0_i32 = arith.constant 0 : i32
    %c0_i32_0 = arith.constant 0 : i32
    %c0_i32_1 = arith.constant 0 : i32
    return %c0_i32, %c0_i32_0 : i32, i32
  }
  func.func @transform_9(%arg0: i32) -> (i32, i32) {
    %c0_i32 = arith.constant 0 : i32
    %c0_i32_0 = arith.constant 0 : i32
    %c0_i32_1 = arith.constant 0 : i32
    return %c0_i32, %c0_i32_0 : i32, i32
  }
  func.func @transform_10(%arg0: i32) -> (i32, i32) {
    %c0_i32 = arith.constant 0 : i32
    %c0_i32_0 = arith.constant 0 : i32
    %c0_i32_1 = arith.constant 0 : i32
    return %c0_i32, %c0_i32_0 : i32, i32
  }
  func.func @transform_11(%arg0: i32) -> (i32, i32) {
    %c0_i32 = arith.constant 0 : i32
    %c0_i32_0 = arith.constant 0 : i32
    return %arg0, %c0_i32 : i32, i32
  }
}

</mosaic_0001>

<llo_original>
// kernel: lenet5_forward.1
$region0: #{lenet5_forward.1}
  #allocation0 [shape = 'u32[]', space=smem, size = 0x4, offset = 0x4, fixed_abs, tag = 'smem constant byte address 0x4 - core index']
  #allocation1 [shape = 'u32[144,128]{1,0:T(1,128)}', space=vmem, size = 0x12000, scoped, tag = 'internal scratch']
  %s0 = inlined_call_operand.vmem [shape: f32[14,8,192], index: 0, kind: input, shape index: {}]
  %s1 = inlined_call_operand.vmem [shape: f32[192,512], index: 1, kind: input, shape index: {}]
  %s2 = inlined_call_operand.vmem [shape: f32[1,84], index: 2, kind: input, shape index: {}]
  %s3 = inlined_call_operand.vmem [shape: f32[5,84,208], index: 3, kind: input, shape index: {}]
  %s4 = inlined_call_operand.vmem [shape: f32[1,80], index: 4, kind: input, shape index: {}]
  %s5 = inlined_call_operand.vmem [shape: f32[5,80,120], index: 5, kind: input, shape index: {}]
  %s6 = inlined_call_operand.vmem [shape: f32[1,120], index: 6, kind: input, shape index: {}]
  %s7 = inlined_call_operand.vmem [shape: f32[120,84], index: 7, kind: input, shape index: {}]
  %s8 = inlined_call_operand.vmem [shape: f32[1,84], index: 8, kind: input, shape index: {}]
  %s9 = inlined_call_operand.vmem [shape: f32[84,27], index: 9, kind: input, shape index: {}]
  %s10 = inlined_call_operand.vmem [shape: f32[1,27], index: 10, kind: input, shape index: {}]
  %s11 = inlined_call_operand.vmem [shape: f32[8,27], index: 11, kind: output, shape index: {}]
  %s12 = sld [smem:[#allocation0]]
  $region54: #{lenet5_forward.1} parent=0
    _
  %s14 = ssub.s32 1, %s12
  %s15 = scalar_select 0, %s14, %s12
  // Predicated region
  $region2: #{lenet5_forward.1} parent=0 // pred_check
    _
  $region3: #{lenet5_forward.1} parent=0 // pred_check_branch
    %17 = sbr.rel (0) target = $region5
  $region4: #{lenet5_forward.1} parent=0 // pred_region
    _
  $region5: #{lenet5_forward.1} parent=0 // pred_fallthru
    _
  // Predicated region
  $region6: #{lenet5_forward.1} parent=0 // pred_check
    _
  $region7: #{lenet5_forward.1} parent=0 // pred_check_branch
    %19 = sbr.rel (0) target = $region9
  $region8: #{lenet5_forward.1} parent=0 // pred_region
    _
  $region9: #{lenet5_forward.1} parent=0 // pred_fallthru
    _
  // Predicated region
  $region10: #{lenet5_forward.1} parent=0 // pred_check
    _
  $region11: #{lenet5_forward.1} parent=0 // pred_check_branch
    %21 = sbr.rel (0) target = $region13
  $region12: #{lenet5_forward.1} parent=0 // pred_region
    _
  $region13: #{lenet5_forward.1} parent=0 // pred_fallthru
    _
  // Predicated region
  $region14: #{lenet5_forward.1} parent=0 // pred_check
    _
  $region15: #{lenet5_forward.1} parent=0 // pred_check_branch
    %23 = sbr.rel (0) target = $region17
  $region16: #{lenet5_forward.1} parent=0 // pred_region
    _
  $region17: #{lenet5_forward.1} parent=0 // pred_fallthru
    _
  // Predicated region
  $region18: #{lenet5_forward.1} parent=0 // pred_check
    _
  $region19: #{lenet5_forward.1} parent=0 // pred_check_branch
    %25 = sbr.rel (0) target = $region21
  $region20: #{lenet5_forward.1} parent=0 // pred_region
    _
  $region21: #{lenet5_forward.1} parent=0 // pred_fallthru
    _
  // Predicated region
  $region22: #{lenet5_forward.1} parent=0 // pred_check
    _
  $region23: #{lenet5_forward.1} parent=0 // pred_check_branch
    %27 = sbr.rel (0) target = $region25
  $region24: #{lenet5_forward.1} parent=0 // pred_region
    _
  $region25: #{lenet5_forward.1} parent=0 // pred_fallthru
    _
  // Predicated region
  $region26: #{lenet5_forward.1} parent=0 // pred_check
    _
  $region27: #{lenet5_forward.1} parent=0 // pred_check_branch
    %29 = sbr.rel (0) target = $region29
  $region28: #{lenet5_forward.1} parent=0 // pred_region
    _
  $region29: #{lenet5_forward.1} parent=0 // pred_fallthru
    _
  // Predicated region
  $region30: #{lenet5_forward.1} parent=0 // pred_check
    _
  $region31: #{lenet5_forward.1} parent=0 // pred_check_branch
    %31 = sbr.rel (0) target = $region33
  $region32: #{lenet5_forward.1} parent=0 // pred_region
    _
  $region33: #{lenet5_forward.1} parent=0 // pred_fallthru
    _
  // Predicated region
  $region34: #{lenet5_forward.1} parent=0 // pred_check
    _
  $region35: #{lenet5_forward.1} parent=0 // pred_check_branch
    %33 = sbr.rel (0) target = $region37
  $region36: #{lenet5_forward.1} parent=0 // pred_region
    _
  $region37: #{lenet5_forward.1} parent=0 // pred_fallthru
    _
  // Predicated region
  $region38: #{lenet5_forward.1} parent=0 // pred_check
    _
  $region39: #{lenet5_forward.1} parent=0 // pred_check_branch
    %35 = sbr.rel (0) target = $region41
  $region40: #{lenet5_forward.1} parent=0 // pred_region
    _
  $region41: #{lenet5_forward.1} parent=0 // pred_fallthru
    _
  // Predicated region
  $region42: #{lenet5_forward.1} parent=0 // pred_check
    _
  $region43: #{lenet5_forward.1} parent=0 // pred_check_branch
    %37 = sbr.rel (0) target = $region45
  $region44: #{lenet5_forward.1} parent=0 // pred_region
    _
  $region45: #{lenet5_forward.1} parent=0 // pred_fallthru
    _
  %v38 = vld [vmem:[%s0] sm:$0xff]
  %v39 = vld [vmem:[%s0 + $0x8] sm:$0xff]
  %v40 = vld [vmem:[%s0 + $0x10] sm:$0xff]
  %v41 = vld [vmem:[%s0 + $0x18] sm:$0xff]
  %v42 = vld [vmem:[%s0 + $0x20] sm:$0xff]
  %v43 = vld [vmem:[%s0 + $0x28] sm:$0xff]
  %v44 = vld [vmem:[%s0 + $0x30] sm:$0xff]
  %v45 = vld [vmem:[%s0 + $0x38] sm:$0xff]
  %v46 = vld [vmem:[%s0 + $0x40] sm:$0xff]
  %v47 = vld [vmem:[%s0 + $0x48] sm:$0xff]
  %v48 = vld [vmem:[%s0 + $0x50] sm:$0xff]
  %v49 = vld [vmem:[%s0 + $0x58] sm:$0xff]
  %v50 = vld [vmem:[%s0 + $0x60] sm:$0xff]
  %v51 = vld [vmem:[%s0 + $0x68] sm:$0xff]
  %v52 = vld [vmem:[%s0 + $0x70] sm:$0xff]
  %v53 = vld [vmem:[%s0 + $0x78] sm:$0xff]
  %v54 = vld [vmem:[%s0 + $0x80] sm:$0xff]
  %v55 = vld [vmem:[%s0 + $0x88] sm:$0xff]
  %v56 = vld [vmem:[%s0 + $0x90] sm:$0xff]
  %v57 = vld [vmem:[%s0 + $0x98] sm:$0xff]
  %v58 = vld [vmem:[%s0 + $0xa0] sm:$0xff]
  %v59 = vld [vmem:[%s0 + $0xa8] sm:$0xff]
  %v60 = vld [vmem:[%s0 + $0xb0] sm:$0xff]
  %v61 = vld [vmem:[%s0 + $0xb8] sm:$0xff]
  %v62 = vld [vmem:[%s0 + $0xc0] sm:$0xff]
  %v63 = vld [vmem:[%s0 + $0xc8] sm:$0xff]
  %v64 = vld [vmem:[%s0 + $0xd0] sm:$0xff]
  %v65 = vld [vmem:[%s0 + $0xd8] sm:$0xff]
  %v66 = vld [vmem:[%s1] sm:$0xff]
  %v67 = vld [vmem:[%s1 + $0x8] sm:$0xff]
  %v68 = vld [vmem:[%s1 + $0x10] sm:$0xff]
  %v69 = vld [vmem:[%s1 + $0x18] sm:$0xff]
  %v70 = vld [vmem:[%s1 + $0x20] sm:$0xff]
  %v71 = vld [vmem:[%s1 + $0x28] sm:$0xff]
  %v72 = vld [vmem:[%s1 + $0x30] sm:$0xff]
  %v73 = vld [vmem:[%s1 + $0x38] sm:$0xff]
  %v74 = vld [vmem:[%s1 + $0x40] sm:$0xff]
  %v75 = vld [vmem:[%s1 + $0x48] sm:$0xff]
  %v76 = vld [vmem:[%s1 + $0x50] sm:$0xff]
  %v77 = vld [vmem:[%s1 + $0x58] sm:$0xff]
  %v78 = vld [vmem:[%s1 + $0x60] sm:$0xff]
  %v79 = vld [vmem:[%s1 + $0x68] sm:$0xff]
  %v80 = vld [vmem:[%s1 + $0x70] sm:$0xff]
  %v81 = vld [vmem:[%s1 + $0x78] sm:$0xff]
  %v82 = vld [vmem:[%s1 + $0x80] sm:$0xff]
  %v83 = vld [vmem:[%s1 + $0x88] sm:$0xff]
  %v84 = vld [vmem:[%s1 + $0x90] sm:$0xff]
  %v85 = vld [vmem:[%s1 + $0x98] sm:$0xff]
  %v86 = vld [vmem:[%s1 + $0xa0] sm:$0xff]
  %v87 = vld [vmem:[%s1 + $0xa8] sm:$0xff]
  %v88 = vld [vmem:[%s1 + $0xb0] sm:$0xff]
  %v89 = vld [vmem:[%s1 + $0xb8] sm:$0xff]
  %v90 = vld [vmem:[%s1 + $0xc0] sm:$0xff]
  %v91 = vld [vmem:[%s1 + $0xc8] sm:$0xff]
  %v92 = vld [vmem:[%s1 + $0xd0] sm:$0xff]
  %v93 = vld [vmem:[%s1 + $0xd8] sm:$0xff]
  %v94 = vld [vmem:[%s1 + $0xe0] sm:$0xff]
  %v95 = vld [vmem:[%s1 + $0xe8] sm:$0xff]
  %v96 = vld [vmem:[%s1 + $0xf0] sm:$0xff]
  %v97 = vld [vmem:[%s1 + $0xf8] sm:$0xff]
  %v98 = vld [vmem:[%s1 + $0x100] sm:$0xff]
  %v99 = vld [vmem:[%s1 + $0x108] sm:$0xff]
  %v100 = vld [vmem:[%s1 + $0x110] sm:$0xff]
  %v101 = vld [vmem:[%s1 + $0x118] sm:$0xff]
  %v102 = vld [vmem:[%s1 + $0x120] sm:$0xff]
  %v103 = vld [vmem:[%s1 + $0x128] sm:$0xff]
  %v104 = vld [vmem:[%s1 + $0x130] sm:$0xff]
  %v105 = vld [vmem:[%s1 + $0x138] sm:$0xff]
  %v106 = vld [vmem:[%s1 + $0x140] sm:$0xff]
  %v107 = vld [vmem:[%s1 + $0x148] sm:$0xff]
  %v108 = vld [vmem:[%s1 + $0x150] sm:$0xff]
  %v109 = vld [vmem:[%s1 + $0x158] sm:$0xff]
  %v110 = vld [vmem:[%s1 + $0x160] sm:$0xff]
  %v111 = vld [vmem:[%s1 + $0x168] sm:$0xff]
  %v112 = vld [vmem:[%s1 + $0x170] sm:$0xff]
  %v113 = vld [vmem:[%s1 + $0x178] sm:$0xff]
  %v114 = vld [vmem:[%s1 + $0x180] sm:$0xff]
  %v115 = vld [vmem:[%s1 + $0x188] sm:$0xff]
  %v116 = vld [vmem:[%s1 + $0x190] sm:$0xff]
  %v117 = vld [vmem:[%s1 + $0x198] sm:$0xff]
  %v118 = vld [vmem:[%s1 + $0x1a0] sm:$0xff]
  %v119 = vld [vmem:[%s1 + $0x1a8] sm:$0xff]
  %v120 = vld [vmem:[%s1 + $0x1b0] sm:$0xff]
  %v121 = vld [vmem:[%s1 + $0x1b8] sm:$0xff]
  %v122 = vld [vmem:[%s1 + $0x1c0] sm:$0xff]
  %v123 = vld [vmem:[%s1 + $0x1c8] sm:$0xff]
  %v124 = vld [vmem:[%s1 + $0x1d0] sm:$0xff]
  %v125 = vld [vmem:[%s1 + $0x1d8] sm:$0xff]
  %v126 = vld [vmem:[%s1 + $0x1e0] sm:$0xff]
  %v127 = vld [vmem:[%s1 + $0x1e8] sm:$0xff]
  %v128 = vld [vmem:[%s1 + $0x1f0] sm:$0xff]
  %v129 = vld [vmem:[%s1 + $0x1f8] sm:$0xff]
  %v130 = vld [vmem:[%s1 + $0x200] sm:$0xff]
  %v131 = vld [vmem:[%s1 + $0x208] sm:$0xff]
  %v132 = vld [vmem:[%s1 + $0x210] sm:$0xff]
  %v133 = vld [vmem:[%s1 + $0x218] sm:$0xff]
  %v134 = vld [vmem:[%s1 + $0x220] sm:$0xff]
  %v135 = vld [vmem:[%s1 + $0x228] sm:$0xff]
  %v136 = vld [vmem:[%s1 + $0x230] sm:$0xff]
  %v137 = vld [vmem:[%s1 + $0x238] sm:$0xff]
  %v138 = vld [vmem:[%s1 + $0x240] sm:$0xff]
  %v139 = vld [vmem:[%s1 + $0x248] sm:$0xff]
  %v140 = vld [vmem:[%s1 + $0x250] sm:$0xff]
  %v141 = vld [vmem:[%s1 + $0x258] sm:$0xff]
  %v142 = vld [vmem:[%s1 + $0x260] sm:$0xff]
  %v143 = vld [vmem:[%s1 + $0x268] sm:$0xff]
  %v144 = vld [vmem:[%s1 + $0x270] sm:$0xff]
  %v145 = vld [vmem:[%s1 + $0x278] sm:$0xff]
  %v146 = vld [vmem:[%s1 + $0x280] sm:$0xff]
  %v147 = vld [vmem:[%s1 + $0x288] sm:$0xff]
  %v148 = vld [vmem:[%s1 + $0x290] sm:$0xff]
  %v149 = vld [vmem:[%s1 + $0x298] sm:$0xff]
  %v150 = vld [vmem:[%s1 + $0x2a0] sm:$0xff]
  %v151 = vld [vmem:[%s1 + $0x2a8] sm:$0xff]
  %v152 = vld [vmem:[%s1 + $0x2b0] sm:$0xff]
  %v153 = vld [vmem:[%s1 + $0x2b8] sm:$0xff]
  %v154 = vld [vmem:[%s1 + $0x2c0] sm:$0xff]
  %v155 = vld [vmem:[%s1 + $0x2c8] sm:$0xff]
  %v156 = vld [vmem:[%s1 + $0x2d0] sm:$0xff]
  %v157 = vld [vmem:[%s1 + $0x2d8] sm:$0xff]
  %v158 = vld [vmem:[%s1 + $0x2e0] sm:$0xff]
  %v159 = vld [vmem:[%s1 + $0x2e8] sm:$0xff]
  %v160 = vld [vmem:[%s1 + $0x2f0] sm:$0xff]
  %v161 = vld [vmem:[%s1 + $0x2f8] sm:$0xff]
  %vm162 = vcmask 523264
  %v164 = vsel %vm162, %v39, 0
  %v167 = vsel %vm162, %v41, 0
  %v170 = vsel %vm162, %v43, 0
  %v173 = vsel %vm162, %v45, 0
  %v176 = vsel %vm162, %v47, 0
  %v179 = vsel %vm162, %v49, 0
  %v182 = vsel %vm162, %v51, 0
  %v185 = vsel %vm162, %v53, 0
  %v188 = vsel %vm162, %v55, 0
  %v191 = vsel %vm162, %v57, 0
  %v194 = vsel %vm162, %v59, 0
  %v197 = vsel %vm162, %v61, 0
  %v200 = vsel %vm162, %v63, 0
  %v203 = vsel %vm162, %v65, 0
  %205 = vmatprep.subr.mxu0 %v67
  %206 = vmatpush1.msra.mxu0 %v66
  %207 = vmatprep.subr.mxu0 %v71
  %208 = vmatpush1.msra.mxu0 %v70
  %209 = vmatprep.subr.mxu0 %v75
  %210 = vmatpush1.msra.mxu0 %v74
  %211 = vmatprep.subr.mxu0 %v79
  %212 = vmatpush1.msra.mxu0 %v78
  %213 = vmatprep.subr.mxu0 %v83
  %214 = vmatpush1.msra.mxu0 %v82
  %215 = vmatprep.subr.mxu0 %v87
  %216 = vmatpush1.msra.mxu0 %v86
  %217 = vmatprep.subr.mxu0 %v91
  %218 = vmatpush1.msra.mxu0 %v90
  %219 = vmatprep.subr.mxu0 %v95
  %220 = vmatpush1.msra.mxu0 %v94
  %221 = vmatprep.subr.mxu0 %v99
  %222 = vmatpush1.msra.mxu0 %v98
  %223 = vmatprep.subr.mxu0 %v103
  %224 = vmatpush1.msra.mxu0 %v102
  %225 = vmatprep.subr.mxu0 %v107
  %226 = vmatpush1.msra.mxu0 %v106
  %227 = vmatprep.subr.mxu0 %v111
  %228 = vmatpush1.msra.mxu0 %v110
  %229 = vmatprep.subr.mxu0 %v115
  %230 = vmatpush1.msra.mxu0 %v114
  %231 = vmatprep.subr.mxu0 %v119
  %232 = vmatpush1.msra.mxu0 %v118
  %233 = vmatprep.subr.mxu0 %v123
  %234 = vmatpush1.msra.mxu0 %v122
  %235 = vmatprep.subr.mxu0 %v127
  %236 = vmatpush1.msra.mxu0 %v126
  %237 = vmatprep.subr.mxu0 %v131
  %238 = vmatpush1.msra.mxu0 %v130
  %239 = vmatprep.subr.mxu0 %v135
  %240 = vmatpush1.msra.mxu0 %v134
  %241 = vmatprep.subr.mxu0 %v139
  %242 = vmatpush1.msra.mxu0 %v138
  %243 = vmatprep.subr.mxu0 %v143
  %244 = vmatpush1.msra.mxu0 %v142
  %245 = vmatprep.subr.mxu0 %v147
  %246 = vmatpush1.msra.mxu0 %v146
  %247 = vmatprep.subr.mxu0 %v151
  %248 = vmatpush1.msra.mxu0 %v150
  %249 = vmatprep.subr.mxu0 %v155
  %250 = vmatpush1.msra.mxu0 %v154
  %251 = vmatprep.subr.mxu0 %v159
  %252 = vmatpush1.msra.mxu0 %v158
  %253 = vmatprep.subr.mxu0 0.0
  %254 = vmatpush1.msra.mxu0 0.0
  %255 = vmatprep.subr.mxu0 0.0
  %256 = vmatpush1.msra.mxu0 0.0
  %257 = vmatprep.subr.mxu0 0.0
  %258 = vmatpush1.msra.mxu0 0.0
  %259 = vmatprep.subr.mxu0 0.0
  %260 = vmatpush1.msra.mxu0 0.0
  %261 = vmatprep.subr.mxu0 0.0
  %262 = vmatpush1.msra.mxu0 0.0
  %263 = vmatprep.subr.mxu0 0.0
  %264 = vmatpush1.msra.mxu0 0.0
  %265 = vmatprep.subr.mxu0 0.0
  %266 = vmatpush1.msra.mxu0 0.0
  %267 = vmatprep.subr.mxu0 0.0
  %268 = vmatpush1.msra.mxu0 0.0
  %269 = vmatprep.mubr.f32.mxu0 %v164
  %270 = vmatmul.mubr.f32.gmra.mrb[0].mxu0 %v38
  %v271 = vpop.f32.mrb[0].mxu0
  %v272 = vadd.f32 0.0, %v271
  %v273 = vpop.f32.mrb[0].mxu0
  %v274 = vadd.f32 0.0, %v273
  %275 = vmatprep.mubr.f32.mxu0 %v167
  %276 = vmatmul.mubr.f32.gmra.mrb[0].mxu0 %v40
  %v277 = vpop.f32.mrb[0].mxu0
  %v278 = vadd.f32 0.0, %v277
  %v279 = vpop.f32.mrb[0].mxu0
  %v280 = vadd.f32 0.0, %v279
  %281 = vmatprep.mubr.f32.mxu0 %v170
  %282 = vmatmul.mubr.f32.gmra.mrb[0].mxu0 %v42
  %v283 = vpop.f32.mrb[0].mxu0
  %v284 = vadd.f32 0.0, %v283
  %v285 = vpop.f32.mrb[0].mxu0
  %v286 = vadd.f32 0.0, %v285
  %287 = vmatprep.mubr.f32.mxu0 %v173
  %288 = vmatmul.mubr.f32.gmra.mrb[0].mxu0 %v44
  %v289 = vpop.f32.mrb[0].mxu0
  %v290 = vadd.f32 0.0, %v289
  %v291 = vpop.f32.mrb[0].mxu0
  %v292 = vadd.f32 0.0, %v291
  %293 = vmatprep.mubr.f32.mxu0 %v176
  %294 = vmatmul.mubr.f32.gmra.mrb[0].mxu0 %v46
  %v295 = vpop.f32.mrb[0].mxu0
  %v296 = vadd.f32 0.0, %v295
  %v297 = vpop.f32.mrb[0].mxu0
  %v298 = vadd.f32 0.0, %v297
  %299 = vmatprep.mubr.f32.mxu0 %v179
  %300 = vmatmul.mubr.f32.gmra.mrb[0].mxu0 %v48
  %v301 = vpop.f32.mrb[0].mxu0
  %v302 = vadd.f32 0.0, %v301
  %v303 = vpop.f32.mrb[0].mxu0
  %v304 = vadd.f32 0.0, %v303
  %305 = vmatprep.mubr.f32.mxu0 %v182
  %306 = vmatmul.mubr.f32.gmra.mrb[0].mxu0 %v50
  %v307 = vpop.f32.mrb[0].mxu0
  %v308 = vadd.f32 0.0, %v307
  %v309 = vpop.f32.mrb[0].mxu0
  %v310 = vadd.f32 0.0, %v309
  %311 = vmatprep.mubr.f32.mxu0 %v185
  %312 = vmatmul.mubr.f32.gmra.mrb[0].mxu0 %v52
  %v313 = vpop.f32.mrb[0].mxu0
  %v314 = vadd.f32 0.0, %v313
  %v315 = vpop.f32.mrb[0].mxu0
  %v316 = vadd.f32 0.0, %v315
  %317 = vmatprep.mubr.f32.mxu0 %v188
  %318 = vmatmul.mubr.f32.gmra.mrb[0].mxu0 %v54
  %v319 = vpop.f32.mrb[0].mxu0
  %v320 = vadd.f32 0.0, %v319
  %v321 = vpop.f32.mrb[0].mxu0
  %v322 = vadd.f32 0.0, %v321
  %323 = vmatprep.mubr.f32.mxu0 %v191
  %324 = vmatmul.mubr.f32.gmra.mrb[0].mxu0 %v56
  %v325 = vpop.f32.mrb[0].mxu0
  %v326 = vadd.f32 0.0, %v325
  %v327 = vpop.f32.mrb[0].mxu0
  %v328 = vadd.f32 0.0, %v327
  %329 = vmatprep.mubr.f32.mxu0 %v194
  %330 = vmatmul.mubr.f32.gmra.mrb[0].mxu0 %v58
  %v331 = vpop.f32.mrb[0].mxu0
  %v332 = vadd.f32 0.0, %v331
  %v333 = vpop.f32.mrb[0].mxu0
  %v334 = vadd.f32 0.0, %v333
  %335 = vmatprep.mubr.f32.mxu0 %v197
  %336 = vmatmul.mubr.f32.gmra.mrb[0].mxu0 %v60
  %v337 = vpop.f32.mrb[0].mxu0
  %v338 = vadd.f32 0.0, %v337
  %v339 = vpop.f32.mrb[0].mxu0
  %v340 = vadd.f32 0.0, %v339
  %341 = vmatprep.mubr.f32.mxu0 %v200
  %342 = vmatmul.mubr.f32.gmra.mrb[0].mxu0 %v62
  %v343 = vpop.f32.mrb[0].mxu0
  %v344 = vadd.f32 0.0, %v343
  %v345 = vpop.f32.mrb[0].mxu0
  %v346 = vadd.f32 0.0, %v345
  %347 = vmatprep.mubr.f32.mxu0 %v203
  %348 = vmatmul.mubr.f32.gmra.mrb[0].mxu0 %v64
  %v349 = vpop.f32.mrb[0].mxu0
  %v350 = vadd.f32 0.0, %v349
  %v351 = vpop.f32.mrb[0].mxu0
  %v352 = vadd.f32 0.0, %v351
  %353 = vdwg.mxu0
  %354 = vmatprep.subr.mxu0 %v69
  %355 = vmatpush1.msra.mxu0 %v68
  %356 = vmatprep.subr.mxu0 %v73
  %357 = vmatpush1.msra.mxu0 %v72
  %358 = vmatprep.subr.mxu0 %v77
  %359 = vmatpush1.msra.mxu0 %v76
  %360 = vmatprep.subr.mxu0 %v81
  %361 = vmatpush1.msra.mxu0 %v80
  %362 = vmatprep.subr.mxu0 %v85
  %363 = vmatpush1.msra.mxu0 %v84
  %364 = vmatprep.subr.mxu0 %v89
  %365 = vmatpush1.msra.mxu0 %v88
  %366 = vmatprep.subr.mxu0 %v93
  %367 = vmatpush1.msra.mxu0 %v92
  %368 = vmatprep.subr.mxu0 %v97
  %369 = vmatpush1.msra.mxu0 %v96
  %370 = vmatprep.subr.mxu0 %v101
  %371 = vmatpush1.msra.mxu0 %v100
  %372 = vmatprep.subr.mxu0 %v105
  %373 = vmatpush1.msra.mxu0 %v104
  %374 = vmatprep.subr.mxu0 %v109
  %375 = vmatpush1.msra.mxu0 %v108
  %376 = vmatprep.subr.mxu0 %v113
  %377 = vmatpush1.msra.mxu0 %v112
  %378 = vmatprep.subr.mxu0 %v117
  %379 = vmatpush1.msra.mxu0 %v116
  %380 = vmatprep.subr.mxu0 %v121
  %381 = vmatpush1.msra.mxu0 %v120
  %382 = vmatprep.subr.mxu0 %v125
  %383 = vmatpush1.msra.mxu0 %v124
  %384 = vmatprep.subr.mxu0 %v129
  %385 = vmatpush1.msra.mxu0 %v128
  %386 = vmatprep.subr.mxu0 %v133
  %387 = vmatpush1.msra.mxu0 %v132
  %388 = vmatprep.subr.mxu0 %v137
  %389 = vmatpush1.msra.mxu0 %v136
  %390 = vmatprep.subr.mxu0 %v141
  %391 = vmatpush1.msra.mxu0 %v140
  %392 = vmatprep.subr.mxu0 %v145
  %393 = vmatpush1.msra.mxu0 %v144
  %394 = vmatprep.subr.mxu0 %v149
  %395 = vmatpush1.msra.mxu0 %v148
  %396 = vmatprep.subr.mxu0 %v153
  %397 = vmatpush1.msra.mxu0 %v152
  %398 = vmatprep.subr.mxu0 %v157
  %399 = vmatpush1.msra.mxu0 %v156
  %400 = vmatprep.subr.mxu0 %v161
  %401 = vmatpush1.msra.mxu0 %v160
  %402 = vmatprep.subr.mxu0 0.0
  %403 = vmatpush1.msra.mxu0 0.0
  %404 = vmatprep.subr.mxu0 0.0
  %405 = vmatpush1.msra.mxu0 0.0
  %406 = vmatprep.subr.mxu0 0.0
  %407 = vmatpush1.msra.mxu0 0.0
  %408 = vmatprep.subr.mxu0 0.0
  %409 = vmatpush1.msra.mxu0 0.0
  %410 = vmatprep.subr.mxu0 0.0
  %411 = vmatpush1.msra.mxu0 0.0
  %412 = vmatprep.subr.mxu0 0.0
  %413 = vmatpush1.msra.mxu0 0.0
  %414 = vmatprep.subr.mxu0 0.0
  %415 = vmatpush1.msra.mxu0 0.0
  %416 = vmatprep.subr.mxu0 0.0
  %417 = vmatpush1.msra.mxu0 0.0
  %418 = vmatprep.mubr.f32.mxu0 %v164
  %419 = vmatmul.mubr.f32.gmra.mrb[0].mxu0 %v38
  %v420 = vpop.f32.mrb[0].mxu0
  %v421 = vadd.f32 0.0, %v420
  %v422 = vpop.f32.mrb[0].mxu0
  %v423 = vadd.f32 0.0, %v422
  %424 = vmatprep.mubr.f32.mxu0 %v167
  %425 = vmatmul.mubr.f32.gmra.mrb[0].mxu0 %v40
  %v426 = vpop.f32.mrb[0].mxu0
  %v427 = vadd.f32 0.0, %v426
  %v428 = vpop.f32.mrb[0].mxu0
  %v429 = vadd.f32 0.0, %v428
  %430 = vmatprep.mubr.f32.mxu0 %v170
  %431 = vmatmul.mubr.f32.gmra.mrb[0].mxu0 %v42
  %v432 = vpop.f32.mrb[0].mxu0
  %v433 = vadd.f32 0.0, %v432
  %v434 = vpop.f32.mrb[0].mxu0
  %v435 = vadd.f32 0.0, %v434
  %436 = vmatprep.mubr.f32.mxu0 %v173
  %437 = vmatmul.mubr.f32.gmra.mrb[0].mxu0 %v44
  %v438 = vpop.f32.mrb[0].mxu0
  %v439 = vadd.f32 0.0, %v438
  %v440 = vpop.f32.mrb[0].mxu0
  %v441 = vadd.f32 0.0, %v440
  %442 = vmatprep.mubr.f32.mxu0 %v176
  %443 = vmatmul.mubr.f32.gmra.mrb[0].mxu0 %v46
  %v444 = vpop.f32.mrb[0].mxu0
  %v445 = vadd.f32 0.0, %v444
  %v446 = vpop.f32.mrb[0].mxu0
  %v447 = vadd.f32 0.0, %v446
  %448 = vmatprep.mubr.f32.mxu0 %v179
  %449 = vmatmul.mubr.f32.gmra.mrb[0].mxu0 %v48
  %v450 = vpop.f32.mrb[0].mxu0
  %v451 = vadd.f32 0.0, %v450
  %v452 = vpop.f32.mrb[0].mxu0
  %v453 = vadd.f32 0.0, %v452
  %454 = vmatprep.mubr.f32.mxu0 %v182
  %455 = vmatmul.mubr.f32.gmra.mrb[0].mxu0 %v50
  %v456 = vpop.f32.mrb[0].mxu0
  %v457 = vadd.f32 0.0, %v456
  %v458 = vpop.f32.mrb[0].mxu0
  %v459 = vadd.f32 0.0, %v458
  %460 = vmatprep.mubr.f32.mxu0 %v185
  %461 = vmatmul.mubr.f32.gmra.mrb[0].mxu0 %v52
  %v462 = vpop.f32.mrb[0].mxu0
  %v463 = vadd.f32 0.0, %v462
  %v464 = vpop.f32.mrb[0].mxu0
  %v465 = vadd.f32 0.0, %v464
  %466 = vmatprep.mubr.f32.mxu0 %v188
  %467 = vmatmul.mubr.f32.gmra.mrb[0].mxu0 %v54
  %v468 = vpop.f32.mrb[0].mxu0
  %v469 = vadd.f32 0.0, %v468
  %v470 = vpop.f32.mrb[0].mxu0
  %v471 = vadd.f32 0.0, %v470
  %472 = vmatprep.mubr.f32.mxu0 %v191
  %473 = vmatmul.mubr.f32.gmra.mrb[0].mxu0 %v56
  %v474 = vpop.f32.mrb[0].mxu0
  %v475 = vadd.f32 0.0, %v474
  %v476 = vpop.f32.mrb[0].mxu0
  %v477 = vadd.f32 0.0, %v476
  %478 = vmatprep.mubr.f32.mxu0 %v194
  %479 = vmatmul.mubr.f32.gmra.mrb[0].mxu0 %v58
  %v480 = vpop.f32.mrb[0].mxu0
  %v481 = vadd.f32 0.0, %v480
  %v482 = vpop.f32.mrb[0].mxu0
  %v483 = vadd.f32 0.0, %v482
  %484 = vmatprep.mubr.f32.mxu0 %v197
  %485 = vmatmul.mubr.f32.gmra.mrb[0].mxu0 %v60
  %v486 = vpop.f32.mrb[0].mxu0
  %v487 = vadd.f32 0.0, %v486
  %v488 = vpop.f32.mrb[0].mxu0
  %v489 = vadd.f32 0.0, %v488
  %490 = vmatprep.mubr.f32.mxu0 %v200
  %491 = vmatmul.mubr.f32.gmra.mrb[0].mxu0 %v62
  %v492 = vpop.f32.mrb[0].mxu0
  %v493 = vadd.f32 0.0, %v492
  %v494 = vpop.f32.mrb[0].mxu0
  %v495 = vadd.f32 0.0, %v494
  %496 = vmatprep.mubr.f32.mxu0 %v203
  %497 = vmatmul.mubr.f32.gmra.mrb[0].mxu0 %v64
  %v498 = vpop.f32.mrb[0].mxu0
  %v499 = vadd.f32 0.0, %v498
  %v500 = vpop.f32.mrb[0].mxu0
  %v501 = vadd.f32 0.0, %v500
  %502 = vdwg.mxu0
  %v503 = vmax.f32 %v272, %v274
  %v504 = vmax.f32 %v278, %v280
  %v505 = vmax.f32 %v284, %v286
  %v506 = vmax.f32 %v290, %v292
  %v507 = vmax.f32 %v296, %v298
  %v508 = vmax.f32 %v302, %v304
  %v509 = vmax.f32 %v308, %v310
  %v510 = vmax.f32 %v314, %v316
  %v511 = vmax.f32 %v320, %v322
  %v512 = vmax.f32 %v326, %v328
  %v513 = vmax.f32 %v332, %v334
  %v514 = vmax.f32 %v338, %v340
  %v515 = vmax.f32 %v344, %v346
  %v516 = vmax.f32 %v350, %v352
  %v517 = vmax.f32 %v421, %v423
  %v518 = vmax.f32 %v427, %v429
  %v519 = vmax.f32 %v433, %v435
  %v520 = vmax.f32 %v439, %v441
  %v521 = vmax.f32 %v445, %v447
  %v522 = vmax.f32 %v451, %v453
  %v523 = vmax.f32 %v457, %v459
  %v524 = vmax.f32 %v463, %v465
  %v525 = vmax.f32 %v469, %v471
  %v526 = vmax.f32 %v475, %v477
  %v527 = vmax.f32 %v481, %v483
  %v528 = vmax.f32 %v487, %v489
  %v529 = vmax.f32 %v493, %v495
  %v530 = vmax.f32 %v499, %v501
  %v531 = vmax.f32 %v503, %v517
  %v532 = vmax.f32 %v504, %v518
  %v533 = vmax.f32 %v505, %v519
  %v534 = vmax.f32 %v506, %v520
  %v535 = vmax.f32 %v507, %v521
  %v536 = vmax.f32 %v508, %v522
  %v537 = vmax.f32 %v509, %v523
  %v538 = vmax.f32 %v510, %v524
  %v539 = vmax.f32 %v511, %v525
  %v540 = vmax.f32 %v512, %v526
  %v541 = vmax.f32 %v513, %v527
  %v542 = vmax.f32 %v514, %v528
  %v543 = vmax.f32 %v515, %v529
  %v544 = vmax.f32 %v516, %v530
  %v545 = vld [vmem:[%s2] sm:$0x1]
  %v547 = vlaneseq
  %v548 = vshrl.u32 %v547, 7
  %v549 = vsub.s32 0, %v548
  %v550 = vrot.slane %v545, %v549
  %v552 = vadd.f32 %v531, %v550
  %v553 = vadd.f32 %v532, %v550
  %v554 = vadd.f32 %v533, %v550
  %v555 = vadd.f32 %v534, %v550
  %v556 = vadd.f32 %v535, %v550
  %v557 = vadd.f32 %v536, %v550
  %v558 = vadd.f32 %v537, %v550
  %v559 = vadd.f32 %v538, %v550
  %v560 = vadd.f32 %v539, %v550
  %v561 = vadd.f32 %v540, %v550
  %v562 = vadd.f32 %v541, %v550
  %v563 = vadd.f32 %v542, %v550
  %v564 = vadd.f32 %v543, %v550
  %v565 = vadd.f32 %v544, %v550
  %v566 = vmax.f32 %v552, 0.0
  %v567 = vmax.f32 %v553, 0.0
  %v568 = vmax.f32 %v554, 0.0
  %v569 = vmax.f32 %v555, 0.0
  %v570 = vmax.f32 %v556, 0.0
  %v571 = vmax.f32 %v557, 0.0
  %v572 = vmax.f32 %v558, 0.0
  %v573 = vmax.f32 %v559, 0.0
  %v574 = vmax.f32 %v560, 0.0
  %v575 = vmax.f32 %v561, 0.0
  %v576 = vmax.f32 %v562, 0.0
  %v577 = vmax.f32 %v563, 0.0
  %v578 = vmax.f32 %v564, 0.0
  %v579 = vmax.f32 %v565, 0.0
  %v580 = vld [vmem:[%s3] sm:$0xff]
  %v581 = vld [vmem:[%s3 + $0x8] sm:$0xff]
  %v582 = vld [vmem:[%s3 + $0x10] sm:$0xff]
  %v583 = vld [vmem:[%s3 + $0x18] sm:$0xff]
  %v584 = vld [vmem:[%s3 + $0x20] sm:$0xff]
  %v585 = vld [vmem:[%s3 + $0x28] sm:$0xff]
  %v586 = vld [vmem:[%s3 + $0x30] sm:$0xff]
  %v587 = vld [vmem:[%s3 + $0x38] sm:$0xff]
  %v588 = vld [vmem:[%s3 + $0x40] sm:$0xff]
  %v589 = vld [vmem:[%s3 + $0x48] sm:$0xff]
  %v590 = vld [vmem:[%s3 + $0x50] sm:$0xff]
  %v591 = vld [vmem:[%s3 + $0x58] sm:$0xff]
  %v592 = vld [vmem:[%s3 + $0x60] sm:$0xff]
  %v593 = vld [vmem:[%s3 + $0x68] sm:$0xff]
  %v594 = vld [vmem:[%s3 + $0x70] sm:$0xff]
  %v595 = vld [vmem:[%s3 + $0x78] sm:$0xff]
  %v596 = vld [vmem:[%s3 + $0x80] sm:$0xff]
  %v597 = vld [vmem:[%s3 + $0x88] sm:$0xff]
  %v598 = vld [vmem:[%s3 + $0x90] sm:$0xff]
  %v599 = vld [vmem:[%s3 + $0x98] sm:$0xff]
  %v600 = vld [vmem:[%s3 + $0xa0] sm:$0xf]
  %v601 = vld [vmem:[%s3 + $0xa8] sm:$0xf]
  %s602 = scalar_lea.vmem %s3, 176
  %v603 = vld [vmem:[%s602] sm:$0xff]
  %v604 = vld [vmem:[%s602 + $0x8] sm:$0xff]
  %v605 = vld [vmem:[%s602 + $0x10] sm:$0xff]
  %v606 = vld [vmem:[%s602 + $0x18] sm:$0xff]
  %v607 = vld [vmem:[%s602 + $0x20] sm:$0xff]
  %v608 = vld [vmem:[%s602 + $0x28] sm:$0xff]
  %v609 = vld [vmem:[%s602 + $0x30] sm:$0xff]
  %v610 = vld [vmem:[%s602 + $0x38] sm:$0xff]
  %v611 = vld [vmem:[%s602 + $0x40] sm:$0xff]
  %v612 = vld [vmem:[%s602 + $0x48] sm:$0xff]
  %v613 = vld [vmem:[%s602 + $0x50] sm:$0xff]
  %v614 = vld [vmem:[%s602 + $0x58] sm:$0xff]
  %v615 = vld [vmem:[%s602 + $0x60] sm:$0xff]
  %v616 = vld [vmem:[%s602 + $0x68] sm:$0xff]
  %v617 = vld [vmem:[%s602 + $0x70] sm:$0xff]
  %v618 = vld [vmem:[%s602 + $0x78] sm:$0xff]
  %v619 = vld [vmem:[%s602 + $0x80] sm:$0xff]
  %v620 = vld [vmem:[%s602 + $0x88] sm:$0xff]
  %v621 = vld [vmem:[%s602 + $0x90] sm:$0xff]
  %v622 = vld [vmem:[%s602 + $0x98] sm:$0xff]
  %v623 = vld [vmem:[%s602 + $0xa0] sm:$0xf]
  %v624 = vld [vmem:[%s602 + $0xa8] sm:$0xf]
  %vm625 = vcmask 687104
  %v627 = vsel %vm625, %v567, 0
  %v630 = vsel %vm625, %v569, 0
  %v633 = vsel %vm625, %v571, 0
  %v636 = vsel %vm625, %v573, 0
  %v639 = vsel %vm625, %v575, 0
  %vm641 = vcmask 1043456
  %v643 = vsel %vm641, %v623, 0
  %v646 = vsel %vm641, %v624, 0
  %648 = vmatprep.subr.mxu0 %v604
  %649 = vmatpush1.msra.mxu0 %v603
  %650 = vmatprep.subr.mxu0 %v606
  %651 = vmatpush1.msra.mxu0 %v605
  %652 = vmatprep.subr.mxu0 %v608
  %653 = vmatpush1.msra.mxu0 %v607
  %654 = vmatprep.subr.mxu0 %v610
  %655 = vmatpush1.msra.mxu0 %v609
  %656 = vmatprep.subr.mxu0 %v612
  %657 = vmatpush1.msra.mxu0 %v611
  %658 = vmatprep.subr.mxu0 %v614
  %659 = vmatpush1.msra.mxu0 %v613
  %660 = vmatprep.subr.mxu0 %v616
  %661 = vmatpush1.msra.mxu0 %v615
  %662 = vmatprep.subr.mxu0 %v618
  %663 = vmatpush1.msra.mxu0 %v617
  %664 = vmatprep.subr.mxu0 %v620
  %665 = vmatpush1.msra.mxu0 %v619
  %666 = vmatprep.subr.mxu0 %v622
  %667 = vmatpush1.msra.mxu0 %v621
  %668 = vmatprep.subr.mxu0 %v646
  %669 = vmatpush1.msra.mxu0 %v643
  %670 = vmatprep.subr.mxu0 0.0
  %671 = vmatpush1.msra.mxu0 0.0
  %672 = vmatprep.subr.mxu0 0.0
  %673 = vmatpush1.msra.mxu0 0.0
  %674 = vmatprep.subr.mxu0 0.0
  %675 = vmatpush1.msra.mxu0 0.0
  %676 = vmatprep.subr.mxu0 0.0
  %677 = vmatpush1.msra.mxu0 0.0
  %678 = vmatprep.subr.mxu0 0.0
  %679 = vmatpush1.msra.mxu0 0.0
  %680 = vmatprep.subr.mxu0 0.0
  %681 = vmatpush1.msra.mxu0 0.0
  %682 = vmatprep.subr.mxu0 0.0
  %683 = vmatpush1.msra.mxu0 0.0
  %684 = vmatprep.subr.mxu0 0.0
  %685 = vmatpush1.msra.mxu0 0.0
  %686 = vmatprep.subr.mxu0 0.0
  %687 = vmatpush1.msra.mxu0 0.0
  %688 = vmatprep.subr.mxu0 0.0
  %689 = vmatpush1.msra.mxu0 0.0
  %690 = vmatprep.subr.mxu0 0.0
  %691 = vmatpush1.msra.mxu0 0.0
  %692 = vmatprep.subr.mxu0 0.0
  %693 = vmatpush1.msra.mxu0 0.0
  %694 = vmatprep.subr.mxu0 0.0
  %695 = vmatpush1.msra.mxu0 0.0
  %696 = vmatprep.subr.mxu0 0.0
  %697 = vmatpush1.msra.mxu0 0.0
  %698 = vmatprep.subr.mxu0 0.0
  %699 = vmatpush1.msra.mxu0 0.0
  %700 = vmatprep.subr.mxu0 0.0
  %701 = vmatpush1.msra.mxu0 0.0
  %702 = vmatprep.subr.mxu0 0.0
  %703 = vmatpush1.msra.mxu0 0.0
  %704 = vmatprep.subr.mxu0 0.0
  %705 = vmatpush1.msra.mxu0 0.0
  %706 = vmatprep.subr.mxu0 0.0
  %707 = vmatpush1.msra.mxu0 0.0
  %708 = vmatprep.subr.mxu0 0.0
  %709 = vmatpush1.msra.mxu0 0.0
  %710 = vmatprep.subr.mxu0 0.0
  %711 = vmatpush1.msra.mxu0 0.0
  %712 = vmatprep.mubr.f32.mxu0 0.0
  %713 = vmatmul.mubr.f32.gmra.mrb[0].mxu0 %v627
  %v714 = vpop.f32.mrb[0].mxu0
  %v715 = vadd.f32 0.0, %v714
  %v716 = vpop.f32.mrb[0].mxu0
  %v717 = vadd.f32 0.0, %v716
  %718 = vmatprep.mubr.f32.mxu0 0.0
  %719 = vmatmul.mubr.f32.gmra.mrb[0].mxu0 %v630
  %v720 = vpop.f32.mrb[0].mxu0
  %v721 = vadd.f32 0.0, %v720
  %v722 = vpop.f32.mrb[0].mxu0
  %v723 = vadd.f32 0.0, %v722
  %724 = vmatprep.mubr.f32.mxu0 0.0
  %725 = vmatmul.mubr.f32.gmra.mrb[0].mxu0 %v633
  %v726 = vpop.f32.mrb[0].mxu0
  %v727 = vadd.f32 0.0, %v726
  %v728 = vpop.f32.mrb[0].mxu0
  %v729 = vadd.f32 0.0, %v728
  %730 = vmatprep.mubr.f32.mxu0 0.0
  %731 = vmatmul.mubr.f32.gmra.mrb[0].mxu0 %v636
  %v732 = vpop.f32.mrb[0].mxu0
  %v733 = vadd.f32 0.0, %v732
  %v734 = vpop.f32.mrb[0].mxu0
  %v735 = vadd.f32 0.0, %v734
  %736 = vmatprep.mubr.f32.mxu0 0.0
  %737 = vmatmul.mubr.f32.gmra.mrb[0].mxu0 %v639
  %v738 = vpop.f32.mrb[0].mxu0
  %v739 = vadd.f32 0.0, %v738
  %v740 = vpop.f32.mrb[0].mxu0
  %v741 = vadd.f32 0.0, %v740
  %742 = vdwg.mxu0
  %v744 = vsel %vm625, %v566, 0
  %v747 = vsel %vm625, %v568, 0
  %v750 = vsel %vm625, %v570, 0
  %v753 = vsel %vm625, %v572, 0
  %v756 = vsel %vm625, %v574, 0
  %v759 = vsel %vm641, %v600, 0
  %v762 = vsel %vm641, %v601, 0
  %764 = vmatprep.subr.mxu0 %v581
  %765 = vmatpush1.msra.mxu0 %v580
  %766 = vmatprep.subr.mxu0 %v583
  %767 = vmatpush1.msra.mxu0 %v582
  %768 = vmatprep.subr.mxu0 %v585
  %769 = vmatpush1.msra.mxu0 %v584
  %770 = vmatprep.subr.mxu0 %v587
  %771 = vmatpush1.msra.mxu0 %v586
  %772 = vmatprep.subr.mxu0 %v589
  %773 = vmatpush1.msra.mxu0 %v588
  %774 = vmatprep.subr.mxu0 %v591
  %775 = vmatpush1.msra.mxu0 %v590
  %776 = vmatprep.subr.mxu0 %v593
  %777 = vmatpush1.msra.mxu0 %v592
  %778 = vmatprep.subr.mxu0 %v595
  %779 = vmatpush1.msra.mxu0 %v594
  %780 = vmatprep.subr.mxu0 %v597
  %781 = vmatpush1.msra.mxu0 %v596
  %782 = vmatprep.subr.mxu0 %v599
  %783 = vmatpush1.msra.mxu0 %v598
  %784 = vmatprep.subr.mxu0 %v762
  %785 = vmatpush1.msra.mxu0 %v759
  %786 = vmatprep.subr.mxu0 0.0
  %787 = vmatpush1.msra.mxu0 0.0
  %788 = vmatprep.subr.mxu0 0.0
  %789 = vmatpush1.msra.mxu0 0.0
  %790 = vmatprep.subr.mxu0 0.0
  %791 = vmatpush1.msra.mxu0 0.0
  %792 = vmatprep.subr.mxu0 0.0
  %793 = vmatpush1.msra.mxu0 0.0
  %794 = vmatprep.subr.mxu0 0.0
  %795 = vmatpush1.msra.mxu0 0.0
  %796 = vmatprep.subr.mxu0 0.0
  %797 = vmatpush1.msra.mxu0 0.0
  %798 = vmatprep.subr.mxu0 0.0
  %799 = vmatpush1.msra.mxu0 0.0
  %800 = vmatprep.subr.mxu0 0.0
  %801 = vmatpush1.msra.mxu0 0.0
  %802 = vmatprep.subr.mxu0 0.0
  %803 = vmatpush1.msra.mxu0 0.0
  %804 = vmatprep.subr.mxu0 0.0
  %805 = vmatpush1.msra.mxu0 0.0
  %806 = vmatprep.subr.mxu0 0.0
  %807 = vmatpush1.msra.mxu0 0.0
  %808 = vmatprep.subr.mxu0 0.0
  %809 = vmatpush1.msra.mxu0 0.0
  %810 = vmatprep.subr.mxu0 0.0
  %811 = vmatpush1.msra.mxu0 0.0
  %812 = vmatprep.subr.mxu0 0.0
  %813 = vmatpush1.msra.mxu0 0.0
  %814 = vmatprep.subr.mxu0 0.0
  %815 = vmatpush1.msra.mxu0 0.0
  %816 = vmatprep.subr.mxu0 0.0
  %817 = vmatpush1.msra.mxu0 0.0
  %818 = vmatprep.subr.mxu0 0.0
  %819 = vmatpush1.msra.mxu0 0.0
  %820 = vmatprep.subr.mxu0 0.0
  %821 = vmatpush1.msra.mxu0 0.0
  %822 = vmatprep.subr.mxu0 0.0
  %823 = vmatpush1.msra.mxu0 0.0
  %824 = vmatprep.subr.mxu0 0.0
  %825 = vmatpush1.msra.mxu0 0.0
  %826 = vmatprep.subr.mxu0 0.0
  %827 = vmatpush1.msra.mxu0 0.0
  %828 = vmatprep.mubr.f32.mxu0 0.0
  %829 = vmatmul.mubr.f32.gmra.mrb[0].mxu0 %v744
  %v830 = vpop.f32.mrb[0].mxu0
  %v831 = vadd.f32 %v715, %v830
  %v832 = vpop.f32.mrb[0].mxu0
  %v833 = vadd.f32 %v717, %v832
  %834 = vmatprep.mubr.f32.mxu0 0.0
  %835 = vmatmul.mubr.f32.gmra.mrb[0].mxu0 %v747
  %v836 = vpop.f32.mrb[0].mxu0
  %v837 = vadd.f32 %v721, %v836
  %v838 = vpop.f32.mrb[0].mxu0
  %v839 = vadd.f32 %v723, %v838
  %840 = vmatprep.mubr.f32.mxu0 0.0
  %841 = vmatmul.mubr.f32.gmra.mrb[0].mxu0 %v750
  %v842 = vpop.f32.mrb[0].mxu0
  %v843 = vadd.f32 %v727, %v842
  %v844 = vpop.f32.mrb[0].mxu0
  %v845 = vadd.f32 %v729, %v844
  %846 = vmatprep.mubr.f32.mxu0 0.0
  %847 = vmatmul.mubr.f32.gmra.mrb[0].mxu0 %v753
  %v848 = vpop.f32.mrb[0].mxu0
  %v849 = vadd.f32 %v733, %v848
  %v850 = vpop.f32.mrb[0].mxu0
  %v851 = vadd.f32 %v735, %v850
  %852 = vmatprep.mubr.f32.mxu0 0.0
  %853 = vmatmul.mubr.f32.gmra.mrb[0].mxu0 %v756
  %v854 = vpop.f32.mrb[0].mxu0
  %v855 = vadd.f32 %v739, %v854
  %v856 = vpop.f32.mrb[0].mxu0
  %v857 = vadd.f32 %v741, %v856
  %858 = vdwg.mxu0
  %s859 = scalar_lea.vmem %s3, 352
  %v860 = vld [vmem:[%s859] sm:$0xff]
  %v861 = vld [vmem:[%s859 + $0x8] sm:$0xff]
  %v862 = vld [vmem:[%s859 + $0x10] sm:$0xff]
  %v863 = vld [vmem:[%s859 + $0x18] sm:$0xff]
  %v864 = vld [vmem:[%s859 + $0x20] sm:$0xff]
  %v865 = vld [vmem:[%s859 + $0x28] sm:$0xff]
  %v866 = vld [vmem:[%s859 + $0x30] sm:$0xff]
  %v867 = vld [vmem:[%s859 + $0x38] sm:$0xff]
  %v868 = vld [vmem:[%s859 + $0x40] sm:$0xff]
  %v869 = vld [vmem:[%s859 + $0x48] sm:$0xff]
  %v870 = vld [vmem:[%s859 + $0x50] sm:$0xff]
  %v871 = vld [vmem:[%s859 + $0x58] sm:$0xff]
  %v872 = vld [vmem:[%s859 + $0x60] sm:$0xff]
  %v873 = vld [vmem:[%s859 + $0x68] sm:$0xff]
  %v874 = vld [vmem:[%s859 + $0x70] sm:$0xff]
  %v875 = vld [vmem:[%s859 + $0x78] sm:$0xff]
  %v876 = vld [vmem:[%s859 + $0x80] sm:$0xff]
  %v877 = vld [vmem:[%s859 + $0x88] sm:$0xff]
  %v878 = vld [vmem:[%s859 + $0x90] sm:$0xff]
  %v879 = vld [vmem:[%s859 + $0x98] sm:$0xff]
  %v880 = vld [vmem:[%s859 + $0xa0] sm:$0xf]
  %v881 = vld [vmem:[%s859 + $0xa8] sm:$0xf]
  %v883 = vsel %vm625, %v576, 0
  %v886 = vsel %vm641, %v880, 0
  %v889 = vsel %vm641, %v881, 0
  %891 = vmatprep.subr.mxu0 %v861
  %892 = vmatpush1.msra.mxu0 %v860
  %893 = vmatprep.subr.mxu0 %v863
  %894 = vmatpush1.msra.mxu0 %v862
  %895 = vmatprep.subr.mxu0 %v865
  %896 = vmatpush1.msra.mxu0 %v864
  %897 = vmatprep.subr.mxu0 %v867
  %898 = vmatpush1.msra.mxu0 %v866
  %899 = vmatprep.subr.mxu0 %v869
  %900 = vmatpush1.msra.mxu0 %v868
  %901 = vmatprep.subr.mxu0 %v871
  %902 = vmatpush1.msra.mxu0 %v870
  %903 = vmatprep.subr.mxu0 %v873
  %904 = vmatpush1.msra.mxu0 %v872
  %905 = vmatprep.subr.mxu0 %v875
  %906 = vmatpush1.msra.mxu0 %v874
  %907 = vmatprep.subr.mxu0 %v877
  %908 = vmatpush1.msra.mxu0 %v876
  %909 = vmatprep.subr.mxu0 %v879
  %910 = vmatpush1.msra.mxu0 %v878
  %911 = vmatprep.subr.mxu0 %v889
  %912 = vmatpush1.msra.mxu0 %v886
  %913 = vmatprep.subr.mxu0 0.0
  %914 = vmatpush1.msra.mxu0 0.0
  %915 = vmatprep.subr.mxu0 0.0
  %916 = vmatpush1.msra.mxu0 0.0
  %917 = vmatprep.subr.mxu0 0.0
  %918 = vmatpush1.msra.mxu0 0.0
  %919 = vmatprep.subr.mxu0 0.0
  %920 = vmatpush1.msra.mxu0 0.0
  %921 = vmatprep.subr.mxu0 0.0
  %922 = vmatpush1.msra.mxu0 0.0
  %923 = vmatprep.subr.mxu0 0.0
  %924 = vmatpush1.msra.mxu0 0.0
  %925 = vmatprep.subr.mxu0 0.0
  %926 = vmatpush1.msra.mxu0 0.0
  %927 = vmatprep.subr.mxu0 0.0
  %928 = vmatpush1.msra.mxu0 0.0
  %929 = vmatprep.subr.mxu0 0.0
  %930 = vmatpush1.msra.mxu0 0.0
  %931 = vmatprep.subr.mxu0 0.0
  %932 = vmatpush1.msra.mxu0 0.0
  %933 = vmatprep.subr.mxu0 0.0
  %934 = vmatpush1.msra.mxu0 0.0
  %935 = vmatprep.subr.mxu0 0.0
  %936 = vmatpush1.msra.mxu0 0.0
  %937 = vmatprep.subr.mxu0 0.0
  %938 = vmatpush1.msra.mxu0 0.0
  %939 = vmatprep.subr.mxu0 0.0
  %940 = vmatpush1.msra.mxu0 0.0
  %941 = vmatprep.subr.mxu0 0.0
  %942 = vmatpush1.msra.mxu0 0.0
  %943 = vmatprep.subr.mxu0 0.0
  %944 = vmatpush1.msra.mxu0 0.0
  %945 = vmatprep.subr.mxu0 0.0
  %946 = vmatpush1.msra.mxu0 0.0
  %947 = vmatprep.subr.mxu0 0.0
  %948 = vmatpush1.msra.mxu0 0.0
  %949 = vmatprep.subr.mxu0 0.0
  %950 = vmatpush1.msra.mxu0 0.0
  %951 = vmatprep.subr.mxu0 0.0
  %952 = vmatpush1.msra.mxu0 0.0
  %953 = vmatprep.subr.mxu0 0.0
  %954 = vmatpush1.msra.mxu0 0.0
  %955 = vmatprep.mubr.f32.mxu0 0.0
  %956 = vmatmul.mubr.f32.gmra.mrb[0].mxu0 %v747
  %v957 = vpop.f32.mrb[0].mxu0
  %v958 = vadd.f32 0.0, %v957
  %v959 = vpop.f32.mrb[0].mxu0
  %v960 = vadd.f32 0.0, %v959
  %961 = vmatprep.mubr.f32.mxu0 0.0
  %962 = vmatmul.mubr.f32.gmra.mrb[0].mxu0 %v750
  %v963 = vpop.f32.mrb[0].mxu0
  %v964 = vadd.f32 0.0, %v963
  %v965 = vpop.f32.mrb[0].mxu0
  %v966 = vadd.f32 0.0, %v965
  %967 = vmatprep.mubr.f32.mxu0 0.0
  %968 = vmatmul.mubr.f32.gmra.mrb[0].mxu0 %v753
  %v969 = vpop.f32.mrb[0].mxu0
  %v970 = vadd.f32 0.0, %v969
  %v971 = vpop.f32.mrb[0].mxu0
  %v972 = vadd.f32 0.0, %v971
  %973 = vmatprep.mubr.f32.mxu0 0.0
  %974 = vmatmul.mubr.f32.gmra.mrb[0].mxu0 %v756
  %v975 = vpop.f32.mrb[0].mxu0
  %v976 = vadd.f32 0.0, %v975
  %v977 = vpop.f32.mrb[0].mxu0
  %v978 = vadd.f32 0.0, %v977
  %979 = vmatprep.mubr.f32.mxu0 0.0
  %980 = vmatmul.mubr.f32.gmra.mrb[0].mxu0 %v883
  %v981 = vpop.f32.mrb[0].mxu0
  %v982 = vadd.f32 0.0, %v981
  %v983 = vpop.f32.mrb[0].mxu0
  %v984 = vadd.f32 0.0, %v983
  %985 = vdwg.mxu0
  %v986 = vadd.f32 %v831, %v958
  %v987 = vadd.f32 %v833, %v960
  %v988 = vadd.f32 %v837, %v964
  %v989 = vadd.f32 %v839, %v966
  %v990 = vadd.f32 %v843, %v970
  %v991 = vadd.f32 %v845, %v972
  %v992 = vadd.f32 %v849, %v976
  %v993 = vadd.f32 %v851, %v978
  %v994 = vadd.f32 %v855, %v982
  %v995 = vadd.f32 %v857, %v984
  %s996 = scalar_lea.vmem %s3, 528
  %v997 = vld [vmem:[%s996] sm:$0xff]
  %v998 = vld [vmem:[%s996 + $0x8] sm:$0xff]
  %v999 = vld [vmem:[%s996 + $0x10] sm:$0xff]
  %v1000 = vld [vmem:[%s996 + $0x18] sm:$0xff]
  %v1001 = vld [vmem:[%s996 + $0x20] sm:$0xff]
  %v1002 = vld [vmem:[%s996 + $0x28] sm:$0xff]
  %v1003 = vld [vmem:[%s996 + $0x30] sm:$0xff]
  %v1004 = vld [vmem:[%s996 + $0x38] sm:$0xff]
  %v1005 = vld [vmem:[%s996 + $0x40] sm:$0xff]
  %v1006 = vld [vmem:[%s996 + $0x48] sm:$0xff]
  %v1007 = vld [vmem:[%s996 + $0x50] sm:$0xff]
  %v1008 = vld [vmem:[%s996 + $0x58] sm:$0xff]
  %v1009 = vld [vmem:[%s996 + $0x60] sm:$0xff]
  %v1010 = vld [vmem:[%s996 + $0x68] sm:$0xff]
  %v1011 = vld [vmem:[%s996 + $0x70] sm:$0xff]
  %v1012 = vld [vmem:[%s996 + $0x78] sm:$0xff]
  %v1013 = vld [vmem:[%s996 + $0x80] sm:$0xff]
  %v1014 = vld [vmem:[%s996 + $0x88] sm:$0xff]
  %v1015 = vld [vmem:[%s996 + $0x90] sm:$0xff]
  %v1016 = vld [vmem:[%s996 + $0x98] sm:$0xff]
  %v1017 = vld [vmem:[%s996 + $0xa0] sm:$0xf]
  %v1018 = vld [vmem:[%s996 + $0xa8] sm:$0xf]
  %v1020 = vsel %vm625, %v577, 0
  %v1023 = vsel %vm641, %v1017, 0
  %v1026 = vsel %vm641, %v1018, 0
  %1028 = vmatprep.subr.mxu0 %v998
  %1029 = vmatpush1.msra.mxu0 %v997
  %1030 = vmatprep.subr.mxu0 %v1000
  %1031 = vmatpush1.msra.mxu0 %v999
  %1032 = vmatprep.subr.mxu0 %v1002
  %1033 = vmatpush1.msra.mxu0 %v1001
  %1034 = vmatprep.subr.mxu0 %v1004
  %1035 = vmatpush1.msra.mxu0 %v1003
  %1036 = vmatprep.subr.mxu0 %v1006
  %1037 = vmatpush1.msra.mxu0 %v1005
  %1038 = vmatprep.subr.mxu0 %v1008
  %1039 = vmatpush1.msra.mxu0 %v1007
  %1040 = vmatprep.subr.mxu0 %v1010
  %1041 = vmatpush1.msra.mxu0 %v1009
  %1042 = vmatprep.subr.mxu0 %v1012
  %1043 = vmatpush1.msra.mxu0 %v1011
  %1044 = vmatprep.subr.mxu0 %v1014
  %1045 = vmatpush1.msra.mxu0 %v1013
  %1046 = vmatprep.subr.mxu0 %v1016
  %1047 = vmatpush1.msra.mxu0 %v1015
  %1048 = vmatprep.subr.mxu0 %v1026
  %1049 = vmatpush1.msra.mxu0 %v1023
  %1050 = vmatprep.subr.mxu0 0.0
  %1051 = vmatpush1.msra.mxu0 0.0
  %1052 = vmatprep.subr.mxu0 0.0
  %1053 = vmatpush1.msra.mxu0 0.0
  %1054 = vmatprep.subr.mxu0 0.0
  %1055 = vmatpush1.msra.mxu0 0.0
  %1056 = vmatprep.subr.mxu0 0.0
  %1057 = vmatpush1.msra.mxu0 0.0
  %1058 = vmatprep.subr.mxu0 0.0
  %1059 = vmatpush1.msra.mxu0 0.0
  %1060 = vmatprep.subr.mxu0 0.0
  %1061 = vmatpush1.msra.mxu0 0.0
  %1062 = vmatprep.subr.mxu0 0.0
  %1063 = vmatpush1.msra.mxu0 0.0
  %1064 = vmatprep.subr.mxu0 0.0
  %1065 = vmatpush1.msra.mxu0 0.0
  %1066 = vmatprep.subr.mxu0 0.0
  %1067 = vmatpush1.msra.mxu0 0.0
  %1068 = vmatprep.subr.mxu0 0.0
  %1069 = vmatpush1.msra.mxu0 0.0
  %1070 = vmatprep.subr.mxu0 0.0
  %1071 = vmatpush1.msra.mxu0 0.0
  %1072 = vmatprep.subr.mxu0 0.0
  %1073 = vmatpush1.msra.mxu0 0.0
  %1074 = vmatprep.subr.mxu0 0.0
  %1075 = vmatpush1.msra.mxu0 0.0
  %1076 = vmatprep.subr.mxu0 0.0
  %1077 = vmatpush1.msra.mxu0 0.0
  %1078 = vmatprep.subr.mxu0 0.0
  %1079 = vmatpush1.msra.mxu0 0.0
  %1080 = vmatprep.subr.mxu0 0.0
  %1081 = vmatpush1.msra.mxu0 0.0
  %1082 = vmatprep.subr.mxu0 0.0
  %1083 = vmatpush1.msra.mxu0 0.0
  %1084 = vmatprep.subr.mxu0 0.0
  %1085 = vmatpush1.msra.mxu0 0.0
  %1086 = vmatprep.subr.mxu0 0.0
  %1087 = vmatpush1.msra.mxu0 0.0
  %1088 = vmatprep.subr.mxu0 0.0
  %1089 = vmatpush1.msra.mxu0 0.0
  %1090 = vmatprep.subr.mxu0 0.0
  %1091 = vmatpush1.msra.mxu0 0.0
  %1092 = vmatprep.mubr.f32.mxu0 0.0
  %1093 = vmatmul.mubr.f32.gmra.mrb[0].mxu0 %v630
  %v1094 = vpop.f32.mrb[0].mxu0
  %v1095 = vadd.f32 0.0, %v1094
  %v1096 = vpop.f32.mrb[0].mxu0
  %v1097 = vadd.f32 0.0, %v1096
  %1098 = vmatprep.mubr.f32.mxu0 0.0
  %1099 = vmatmul.mubr.f32.gmra.mrb[0].mxu0 %v633
  %v1100 = vpop.f32.mrb[0].mxu0
  %v1101 = vadd.f32 0.0, %v1100
  %v1102 = vpop.f32.mrb[0].mxu0
  %v1103 = vadd.f32 0.0, %v1102
  %1104 = vmatprep.mubr.f32.mxu0 0.0
  %1105 = vmatmul.mubr.f32.gmra.mrb[0].mxu0 %v636
  %v1106 = vpop.f32.mrb[0].mxu0
  %v1107 = vadd.f32 0.0, %v1106
  %v1108 = vpop.f32.mrb[0].mxu0
  %v1109 = vadd.f32 0.0, %v1108
  %1110 = vmatprep.mubr.f32.mxu0 0.0
  %1111 = vmatmul.mubr.f32.gmra.mrb[0].mxu0 %v639
  %v1112 = vpop.f32.mrb[0].mxu0
  %v1113 = vadd.f32 0.0, %v1112
  %v1114 = vpop.f32.mrb[0].mxu0
  %v1115 = vadd.f32 0.0, %v1114
  %1116 = vmatprep.mubr.f32.mxu0 0.0
  %1117 = vmatmul.mubr.f32.gmra.mrb[0].mxu0 %v1020
  %v1118 = vpop.f32.mrb[0].mxu0
  %v1119 = vadd.f32 0.0, %v1118
  %v1120 = vpop.f32.mrb[0].mxu0
  %v1121 = vadd.f32 0.0, %v1120
  %1122 = vdwg.mxu0
  %v1123 = vadd.f32 %v986, %v1095
  %v1124 = vadd.f32 %v987, %v1097
  %v1125 = vadd.f32 %v988, %v1101
  %v1126 = vadd.f32 %v989, %v1103
  %v1127 = vadd.f32 %v990, %v1107
  %v1128 = vadd.f32 %v991, %v1109
  %v1129 = vadd.f32 %v992, %v1113
  %v1130 = vadd.f32 %v993, %v1115
  %v1131 = vadd.f32 %v994, %v1119
  %v1132 = vadd.f32 %v995, %v1121
  %s1133 = scalar_lea.vmem %s3, 704
  %v1134 = vld [vmem:[%s1133] sm:$0xff]
  %v1135 = vld [vmem:[%s1133 + $0x8] sm:$0xff]
  %v1136 = vld [vmem:[%s1133 + $0x10] sm:$0xff]
  %v1137 = vld [vmem:[%s1133 + $0x18] sm:$0xff]
  %v1138 = vld [vmem:[%s1133 + $0x20] sm:$0xff]
  %v1139 = vld [vmem:[%s1133 + $0x28] sm:$0xff]
  %v1140 = vld [vmem:[%s1133 + $0x30] sm:$0xff]
  %v1141 = vld [vmem:[%s1133 + $0x38] sm:$0xff]
  %v1142 = vld [vmem:[%s1133 + $0x40] sm:$0xff]
  %v1143 = vld [vmem:[%s1133 + $0x48] sm:$0xff]
  %v1144 = vld [vmem:[%s1133 + $0x50] sm:$0xff]
  %v1145 = vld [vmem:[%s1133 + $0x58] sm:$0xff]
  %v1146 = vld [vmem:[%s1133 + $0x60] sm:$0xff]
  %v1147 = vld [vmem:[%s1133 + $0x68] sm:$0xff]
  %v1148 = vld [vmem:[%s1133 + $0x70] sm:$0xff]
  %v1149 = vld [vmem:[%s1133 + $0x78] sm:$0xff]
  %v1150 = vld [vmem:[%s1133 + $0x80] sm:$0xff]
  %v1151 = vld [vmem:[%s1133 + $0x88] sm:$0xff]
  %v1152 = vld [vmem:[%s1133 + $0x90] sm:$0xff]
  %v1153 = vld [vmem:[%s1133 + $0x98] sm:$0xff]
  %v1154 = vld [vmem:[%s1133 + $0xa0] sm:$0xf]
  %v1155 = vld [vmem:[%s1133 + $0xa8] sm:$0xf]
  %v1157 = vsel %vm625, %v578, 0
  %v1160 = vsel %vm641, %v1154, 0
  %v1163 = vsel %vm641, %v1155, 0
  %1165 = vmatprep.subr.mxu0 %v1135
  %1166 = vmatpush1.msra.mxu0 %v1134
  %1167 = vmatprep.subr.mxu0 %v1137
  %1168 = vmatpush1.msra.mxu0 %v1136
  %1169 = vmatprep.subr.mxu0 %v1139
  %1170 = vmatpush1.msra.mxu0 %v1138
  %1171 = vmatprep.subr.mxu0 %v1141
  %1172 = vmatpush1.msra.mxu0 %v1140
  %1173 = vmatprep.subr.mxu0 %v1143
  %1174 = vmatpush1.msra.mxu0 %v1142
  %1175 = vmatprep.subr.mxu0 %v1145
  %1176 = vmatpush1.msra.mxu0 %v1144
  %1177 = vmatprep.subr.mxu0 %v1147
  %1178 = vmatpush1.msra.mxu0 %v1146
  %1179 = vmatprep.subr.mxu0 %v1149
  %1180 = vmatpush1.msra.mxu0 %v1148
  %1181 = vmatprep.subr.mxu0 %v1151
  %1182 = vmatpush1.msra.mxu0 %v1150
  %1183 = vmatprep.subr.mxu0 %v1153
  %1184 = vmatpush1.msra.mxu0 %v1152
  %1185 = vmatprep.subr.mxu0 %v1163
  %1186 = vmatpush1.msra.mxu0 %v1160
  %1187 = vmatprep.subr.mxu0 0.0
  %1188 = vmatpush1.msra.mxu0 0.0
  %1189 = vmatprep.subr.mxu0 0.0
  %1190 = vmatpush1.msra.mxu0 0.0
  %1191 = vmatprep.subr.mxu0 0.0
  %1192 = vmatpush1.msra.mxu0 0.0
  %1193 = vmatprep.subr.mxu0 0.0
  %1194 = vmatpush1.msra.mxu0 0.0
  %1195 = vmatprep.subr.mxu0 0.0
  %1196 = vmatpush1.msra.mxu0 0.0
  %1197 = vmatprep.subr.mxu0 0.0
  %1198 = vmatpush1.msra.mxu0 0.0
  %1199 = vmatprep.subr.mxu0 0.0
  %1200 = vmatpush1.msra.mxu0 0.0
  %1201 = vmatprep.subr.mxu0 0.0
  %1202 = vmatpush1.msra.mxu0 0.0
  %1203 = vmatprep.subr.mxu0 0.0
  %1204 = vmatpush1.msra.mxu0 0.0
  %1205 = vmatprep.subr.mxu0 0.0
  %1206 = vmatpush1.msra.mxu0 0.0
  %1207 = vmatprep.subr.mxu0 0.0
  %1208 = vmatpush1.msra.mxu0 0.0
  %1209 = vmatprep.subr.mxu0 0.0
  %1210 = vmatpush1.msra.mxu0 0.0
  %1211 = vmatprep.subr.mxu0 0.0
  %1212 = vmatpush1.msra.mxu0 0.0
  %1213 = vmatprep.subr.mxu0 0.0
  %1214 = vmatpush1.msra.mxu0 0.0
  %1215 = vmatprep.subr.mxu0 0.0
  %1216 = vmatpush1.msra.mxu0 0.0
  %1217 = vmatprep.subr.mxu0 0.0
  %1218 = vmatpush1.msra.mxu0 0.0
  %1219 = vmatprep.subr.mxu0 0.0
  %1220 = vmatpush1.msra.mxu0 0.0
  %1221 = vmatprep.subr.mxu0 0.0
  %1222 = vmatpush1.msra.mxu0 0.0
  %1223 = vmatprep.subr.mxu0 0.0
  %1224 = vmatpush1.msra.mxu0 0.0
  %1225 = vmatprep.subr.mxu0 0.0
  %1226 = vmatpush1.msra.mxu0 0.0
  %1227 = vmatprep.subr.mxu0 0.0
  %1228 = vmatpush1.msra.mxu0 0.0
  %1229 = vmatprep.mubr.f32.mxu0 0.0
  %1230 = vmatmul.mubr.f32.gmra.mrb[0].mxu0 %v750
  %v1231 = vpop.f32.mrb[0].mxu0
  %v1232 = vadd.f32 0.0, %v1231
  %v1233 = vpop.f32.mrb[0].mxu0
  %v1234 = vadd.f32 0.0, %v1233
  %1235 = vmatprep.mubr.f32.mxu0 0.0
  %1236 = vmatmul.mubr.f32.gmra.mrb[0].mxu0 %v753
  %v1237 = vpop.f32.mrb[0].mxu0
  %v1238 = vadd.f32 0.0, %v1237
  %v1239 = vpop.f32.mrb[0].mxu0
  %v1240 = vadd.f32 0.0, %v1239
  %1241 = vmatprep.mubr.f32.mxu0 0.0
  %1242 = vmatmul.mubr.f32.gmra.mrb[0].mxu0 %v756
  %v1243 = vpop.f32.mrb[0].mxu0
  %v1244 = vadd.f32 0.0, %v1243
  %v1245 = vpop.f32.mrb[0].mxu0
  %v1246 = vadd.f32 0.0, %v1245
  %1247 = vmatprep.mubr.f32.mxu0 0.0
  %1248 = vmatmul.mubr.f32.gmra.mrb[0].mxu0 %v883
  %v1249 = vpop.f32.mrb[0].mxu0
  %v1250 = vadd.f32 0.0, %v1249
  %v1251 = vpop.f32.mrb[0].mxu0
  %v1252 = vadd.f32 0.0, %v1251
  %1253 = vmatprep.mubr.f32.mxu0 0.0
  %1254 = vmatmul.mubr.f32.gmra.mrb[0].mxu0 %v1157
  %v1255 = vpop.f32.mrb[0].mxu0
  %v1256 = vadd.f32 0.0, %v1255
  %v1257 = vpop.f32.mrb[0].mxu0
  %v1258 = vadd.f32 0.0, %v1257
  %1259 = vdwg.mxu0
  %v1260 = vadd.f32 %v1123, %v1232
  %v1261 = vadd.f32 %v1124, %v1234
  %v1262 = vadd.f32 %v1125, %v1238
  %v1263 = vadd.f32 %v1126, %v1240
  %v1264 = vadd.f32 %v1127, %v1244
  %v1265 = vadd.f32 %v1128, %v1246
  %v1266 = vadd.f32 %v1129, %v1250
  %v1267 = vadd.f32 %v1130, %v1252
  %v1268 = vadd.f32 %v1131, %v1256
  %v1269 = vadd.f32 %v1132, %v1258
  %v1270 = vmax.f32 %v1260, %v1261
  %v1271 = vmax.f32 %v1262, %v1263
  %v1272 = vmax.f32 %v1264, %v1265
  %v1273 = vmax.f32 %v1266, %v1267
  %v1274 = vmax.f32 %v1268, %v1269
  %1275 = vmatprep.subr.mxu0 %v604
  %1276 = vmatpush1.msra.mxu0 %v603
  %1277 = vmatprep.subr.mxu0 %v606
  %1278 = vmatpush1.msra.mxu0 %v605
  %1279 = vmatprep.subr.mxu0 %v608
  %1280 = vmatpush1.msra.mxu0 %v607
  %1281 = vmatprep.subr.mxu0 %v610
  %1282 = vmatpush1.msra.mxu0 %v609
  %1283 = vmatprep.subr.mxu0 %v612
  %1284 = vmatpush1.msra.mxu0 %v611
  %1285 = vmatprep.subr.mxu0 %v614
  %1286 = vmatpush1.msra.mxu0 %v613
  %1287 = vmatprep.subr.mxu0 %v616
  %1288 = vmatpush1.msra.mxu0 %v615
  %1289 = vmatprep.subr.mxu0 %v618
  %1290 = vmatpush1.msra.mxu0 %v617
  %1291 = vmatprep.subr.mxu0 %v620
  %1292 = vmatpush1.msra.mxu0 %v619
  %1293 = vmatprep.subr.mxu0 %v622
  %1294 = vmatpush1.msra.mxu0 %v621
  %1295 = vmatprep.subr.mxu0 %v646
  %1296 = vmatpush1.msra.mxu0 %v643
  %1297 = vmatprep.subr.mxu0 0.0
  %1298 = vmatpush1.msra.mxu0 0.0
  %1299 = vmatprep.subr.mxu0 0.0
  %1300 = vmatpush1.msra.mxu0 0.0
  %1301 = vmatprep.subr.mxu0 0.0
  %1302 = vmatpush1.msra.mxu0 0.0
  %1303 = vmatprep.subr.mxu0 0.0
  %1304 = vmatpush1.msra.mxu0 0.0
  %1305 = vmatprep.subr.mxu0 0.0
  %1306 = vmatpush1.msra.mxu0 0.0
  %1307 = vmatprep.subr.mxu0 0.0
  %1308 = vmatpush1.msra.mxu0 0.0
  %1309 = vmatprep.subr.mxu0 0.0
  %1310 = vmatpush1.msra.mxu0 0.0
  %1311 = vmatprep.subr.mxu0 0.0
  %1312 = vmatpush1.msra.mxu0 0.0
  %1313 = vmatprep.subr.mxu0 0.0
  %1314 = vmatpush1.msra.mxu0 0.0
  %1315 = vmatprep.subr.mxu0 0.0
  %1316 = vmatpush1.msra.mxu0 0.0
  %1317 = vmatprep.subr.mxu0 0.0
  %1318 = vmatpush1.msra.mxu0 0.0
  %1319 = vmatprep.subr.mxu0 0.0
  %1320 = vmatpush1.msra.mxu0 0.0
  %1321 = vmatprep.subr.mxu0 0.0
  %1322 = vmatpush1.msra.mxu0 0.0
  %1323 = vmatprep.subr.mxu0 0.0
  %1324 = vmatpush1.msra.mxu0 0.0
  %1325 = vmatprep.subr.mxu0 0.0
  %1326 = vmatpush1.msra.mxu0 0.0
  %1327 = vmatprep.subr.mxu0 0.0
  %1328 = vmatpush1.msra.mxu0 0.0
  %1329 = vmatprep.subr.mxu0 0.0
  %1330 = vmatpush1.msra.mxu0 0.0
  %1331 = vmatprep.subr.mxu0 0.0
  %1332 = vmatpush1.msra.mxu0 0.0
  %1333 = vmatprep.subr.mxu0 0.0
  %1334 = vmatpush1.msra.mxu0 0.0
  %1335 = vmatprep.subr.mxu0 0.0
  %1336 = vmatpush1.msra.mxu0 0.0
  %1337 = vmatprep.subr.mxu0 0.0
  %1338 = vmatpush1.msra.mxu0 0.0
  %1339 = vmatprep.mubr.f32.mxu0 0.0
  %1340 = vmatmul.mubr.f32.gmra.mrb[0].mxu0 %v747
  %v1341 = vpop.f32.mrb[0].mxu0
  %v1342 = vadd.f32 0.0, %v1341
  %v1343 = vpop.f32.mrb[0].mxu0
  %v1344 = vadd.f32 0.0, %v1343
  %1345 = vmatprep.mubr.f32.mxu0 0.0
  %1346 = vmatmul.mubr.f32.gmra.mrb[0].mxu0 %v750
  %v1347 = vpop.f32.mrb[0].mxu0
  %v1348 = vadd.f32 0.0, %v1347
  %v1349 = vpop.f32.mrb[0].mxu0
  %v1350 = vadd.f32 0.0, %v1349
  %1351 = vmatprep.mubr.f32.mxu0 0.0
  %1352 = vmatmul.mubr.f32.gmra.mrb[0].mxu0 %v753
  %v1353 = vpop.f32.mrb[0].mxu0
  %v1354 = vadd.f32 0.0, %v1353
  %v1355 = vpop.f32.mrb[0].mxu0
  %v1356 = vadd.f32 0.0, %v1355
  %1357 = vmatprep.mubr.f32.mxu0 0.0
  %1358 = vmatmul.mubr.f32.gmra.mrb[0].mxu0 %v756
  %v1359 = vpop.f32.mrb[0].mxu0
  %v1360 = vadd.f32 0.0, %v1359
  %v1361 = vpop.f32.mrb[0].mxu0
  %v1362 = vadd.f32 0.0, %v1361
  %1363 = vmatprep.mubr.f32.mxu0 0.0
  %1364 = vmatmul.mubr.f32.gmra.mrb[0].mxu0 %v883
  %v1365 = vpop.f32.mrb[0].mxu0
  %v1366 = vadd.f32 0.0, %v1365
  %v1367 = vpop.f32.mrb[0].mxu0
  %v1368 = vadd.f32 0.0, %v1367
  %1369 = vdwg.mxu0
  %1370 = vmatprep.subr.mxu0 %v581
  %1371 = vmatpush1.msra.mxu0 %v580
  %1372 = vmatprep.subr.mxu0 %v583
  %1373 = vmatpush1.msra.mxu0 %v582
  %1374 = vmatprep.subr.mxu0 %v585
  %1375 = vmatpush1.msra.mxu0 %v584
  %1376 = vmatprep.subr.mxu0 %v587
  %1377 = vmatpush1.msra.mxu0 %v586
  %1378 = vmatprep.subr.mxu0 %v589
  %1379 = vmatpush1.msra.mxu0 %v588
  %1380 = vmatprep.subr.mxu0 %v591
  %1381 = vmatpush1.msra.mxu0 %v590
  %1382 = vmatprep.subr.mxu0 %v593
  %1383 = vmatpush1.msra.mxu0 %v592
  %1384 = vmatprep.subr.mxu0 %v595
  %1385 = vmatpush1.msra.mxu0 %v594
  %1386 = vmatprep.subr.mxu0 %v597
  %1387 = vmatpush1.msra.mxu0 %v596
  %1388 = vmatprep.subr.mxu0 %v599
  %1389 = vmatpush1.msra.mxu0 %v598
  %1390 = vmatprep.subr.mxu0 %v762
  %1391 = vmatpush1.msra.mxu0 %v759
  %1392 = vmatprep.subr.mxu0 0.0
  %1393 = vmatpush1.msra.mxu0 0.0
  %1394 = vmatprep.subr.mxu0 0.0
  %1395 = vmatpush1.msra.mxu0 0.0
  %1396 = vmatprep.subr.mxu0 0.0
  %1397 = vmatpush1.msra.mxu0 0.0
  %1398 = vmatprep.subr.mxu0 0.0
  %1399 = vmatpush1.msra.mxu0 0.0
  %1400 = vmatprep.subr.mxu0 0.0
  %1401 = vmatpush1.msra.mxu0 0.0
  %1402 = vmatprep.subr.mxu0 0.0
  %1403 = vmatpush1.msra.mxu0 0.0
  %1404 = vmatprep.subr.mxu0 0.0
  %1405 = vmatpush1.msra.mxu0 0.0
  %1406 = vmatprep.subr.mxu0 0.0
  %1407 = vmatpush1.msra.mxu0 0.0
  %1408 = vmatprep.subr.mxu0 0.0
  %1409 = vmatpush1.msra.mxu0 0.0
  %1410 = vmatprep.subr.mxu0 0.0
  %1411 = vmatpush1.msra.mxu0 0.0
  %1412 = vmatprep.subr.mxu0 0.0
  %1413 = vmatpush1.msra.mxu0 0.0
  %1414 = vmatprep.subr.mxu0 0.0
  %1415 = vmatpush1.msra.mxu0 0.0
  %1416 = vmatprep.subr.mxu0 0.0
  %1417 = vmatpush1.msra.mxu0 0.0
  %1418 = vmatprep.subr.mxu0 0.0
  %1419 = vmatpush1.msra.mxu0 0.0
  %1420 = vmatprep.subr.mxu0 0.0
  %1421 = vmatpush1.msra.mxu0 0.0
  %1422 = vmatprep.subr.mxu0 0.0
  %1423 = vmatpush1.msra.mxu0 0.0
  %1424 = vmatprep.subr.mxu0 0.0
  %1425 = vmatpush1.msra.mxu0 0.0
  %1426 = vmatprep.subr.mxu0 0.0
  %1427 = vmatpush1.msra.mxu0 0.0
  %1428 = vmatprep.subr.mxu0 0.0
  %1429 = vmatpush1.msra.mxu0 0.0
  %1430 = vmatprep.subr.mxu0 0.0
  %1431 = vmatpush1.msra.mxu0 0.0
  %1432 = vmatprep.subr.mxu0 0.0
  %1433 = vmatpush1.msra.mxu0 0.0
  %1434 = vmatprep.mubr.f32.mxu0 0.0
  %1435 = vmatmul.mubr.f32.gmra.mrb[0].mxu0 %v627
  %v1436 = vpop.f32.mrb[0].mxu0
  %v1437 = vadd.f32 %v1342, %v1436
  %v1438 = vpop.f32.mrb[0].mxu0
  %v1439 = vadd.f32 %v1344, %v1438
  %1440 = vmatprep.mubr.f32.mxu0 0.0
  %1441 = vmatmul.mubr.f32.gmra.mrb[0].mxu0 %v630
  %v1442 = vpop.f32.mrb[0].mxu0
  %v1443 = vadd.f32 %v1348, %v1442
  %v1444 = vpop.f32.mrb[0].mxu0
  %v1445 = vadd.f32 %v1350, %v1444
  %1446 = vmatprep.mubr.f32.mxu0 0.0
  %1447 = vmatmul.mubr.f32.gmra.mrb[0].mxu0 %v633
  %v1448 = vpop.f32.mrb[0].mxu0
  %v1449 = vadd.f32 %v1354, %v1448
  %v1450 = vpop.f32.mrb[0].mxu0
  %v1451 = vadd.f32 %v1356, %v1450
  %1452 = vmatprep.mubr.f32.mxu0 0.0
  %1453 = vmatmul.mubr.f32.gmra.mrb[0].mxu0 %v636
  %v1454 = vpop.f32.mrb[0].mxu0
  %v1455 = vadd.f32 %v1360, %v1454
  %v1456 = vpop.f32.mrb[0].mxu0
  %v1457 = vadd.f32 %v1362, %v1456
  %1458 = vmatprep.mubr.f32.mxu0 0.0
  %1459 = vmatmul.mubr.f32.gmra.mrb[0].mxu0 %v639
  %v1460 = vpop.f32.mrb[0].mxu0
  %v1461 = vadd.f32 %v1366, %v1460
  %v1462 = vpop.f32.mrb[0].mxu0
  %v1463 = vadd.f32 %v1368, %v1462
  %1464 = vdwg.mxu0
  %1465 = vmatprep.subr.mxu0 %v861
  %1466 = vmatpush1.msra.mxu0 %v860
  %1467 = vmatprep.subr.mxu0 %v863
  %1468 = vmatpush1.msra.mxu0 %v862
  %1469 = vmatprep.subr.mxu0 %v865
  %1470 = vmatpush1.msra.mxu0 %v864
  %1471 = vmatprep.subr.mxu0 %v867
  %1472 = vmatpush1.msra.mxu0 %v866
  %1473 = vmatprep.subr.mxu0 %v869
  %1474 = vmatpush1.msra.mxu0 %v868
  %1475 = vmatprep.subr.mxu0 %v871
  %1476 = vmatpush1.msra.mxu0 %v870
  %1477 = vmatprep.subr.mxu0 %v873
  %1478 = vmatpush1.msra.mxu0 %v872
  %1479 = vmatprep.subr.mxu0 %v875
  %1480 = vmatpush1.msra.mxu0 %v874
  %1481 = vmatprep.subr.mxu0 %v877
  %1482 = vmatpush1.msra.mxu0 %v876
  %1483 = vmatprep.subr.mxu0 %v879
  %1484 = vmatpush1.msra.mxu0 %v878
  %1485 = vmatprep.subr.mxu0 %v889
  %1486 = vmatpush1.msra.mxu0 %v886
  %1487 = vmatprep.subr.mxu0 0.0
  %1488 = vmatpush1.msra.mxu0 0.0
  %1489 = vmatprep.subr.mxu0 0.0
  %1490 = vmatpush1.msra.mxu0 0.0
  %1491 = vmatprep.subr.mxu0 0.0
  %1492 = vmatpush1.msra.mxu0 0.0
  %1493 = vmatprep.subr.mxu0 0.0
  %1494 = vmatpush1.msra.mxu0 0.0
  %1495 = vmatprep.subr.mxu0 0.0
  %1496 = vmatpush1.msra.mxu0 0.0
  %1497 = vmatprep.subr.mxu0 0.0
  %1498 = vmatpush1.msra.mxu0 0.0
  %1499 = vmatprep.subr.mxu0 0.0
  %1500 = vmatpush1.msra.mxu0 0.0
  %1501 = vmatprep.subr.mxu0 0.0
  %1502 = vmatpush1.msra.mxu0 0.0
  %1503 = vmatprep.subr.mxu0 0.0
  %1504 = vmatpush1.msra.mxu0 0.0
  %1505 = vmatprep.subr.mxu0 0.0
  %1506 = vmatpush1.msra.mxu0 0.0
  %1507 = vmatprep.subr.mxu0 0.0
  %1508 = vmatpush1.msra.mxu0 0.0
  %1509 = vmatprep.subr.mxu0 0.0
  %1510 = vmatpush1.msra.mxu0 0.0
  %1511 = vmatprep.subr.mxu0 0.0
  %1512 = vmatpush1.msra.mxu0 0.0
  %1513 = vmatprep.subr.mxu0 0.0
  %1514 = vmatpush1.msra.mxu0 0.0
  %1515 = vmatprep.subr.mxu0 0.0
  %1516 = vmatpush1.msra.mxu0 0.0
  %1517 = vmatprep.subr.mxu0 0.0
  %1518 = vmatpush1.msra.mxu0 0.0
  %1519 = vmatprep.subr.mxu0 0.0
  %1520 = vmatpush1.msra.mxu0 0.0
  %1521 = vmatprep.subr.mxu0 0.0
  %1522 = vmatpush1.msra.mxu0 0.0
  %1523 = vmatprep.subr.mxu0 0.0
  %1524 = vmatpush1.msra.mxu0 0.0
  %1525 = vmatprep.subr.mxu0 0.0
  %1526 = vmatpush1.msra.mxu0 0.0
  %1527 = vmatprep.subr.mxu0 0.0
  %1528 = vmatpush1.msra.mxu0 0.0
  %1529 = vmatprep.mubr.f32.mxu0 0.0
  %1530 = vmatmul.mubr.f32.gmra.mrb[0].mxu0 %v630
  %v1531 = vpop.f32.mrb[0].mxu0
  %v1532 = vadd.f32 0.0, %v1531
  %v1533 = vpop.f32.mrb[0].mxu0
  %v1534 = vadd.f32 0.0, %v1533
  %1535 = vmatprep.mubr.f32.mxu0 0.0
  %1536 = vmatmul.mubr.f32.gmra.mrb[0].mxu0 %v633
  %v1537 = vpop.f32.mrb[0].mxu0
  %v1538 = vadd.f32 0.0, %v1537
  %v1539 = vpop.f32.mrb[0].mxu0
  %v1540 = vadd.f32 0.0, %v1539
  %1541 = vmatprep.mubr.f32.mxu0 0.0
  %1542 = vmatmul.mubr.f32.gmra.mrb[0].mxu0 %v636
  %v1543 = vpop.f32.mrb[0].mxu0
  %v1544 = vadd.f32 0.0, %v1543
  %v1545 = vpop.f32.mrb[0].mxu0
  %v1546 = vadd.f32 0.0, %v1545
  %1547 = vmatprep.mubr.f32.mxu0 0.0
  %1548 = vmatmul.mubr.f32.gmra.mrb[0].mxu0 %v639
  %v1549 = vpop.f32.mrb[0].mxu0
  %v1550 = vadd.f32 0.0, %v1549
  %v1551 = vpop.f32.mrb[0].mxu0
  %v1552 = vadd.f32 0.0, %v1551
  %1553 = vmatprep.mubr.f32.mxu0 0.0
  %1554 = vmatmul.mubr.f32.gmra.mrb[0].mxu0 %v1020
  %v1555 = vpop.f32.mrb[0].mxu0
  %v1556 = vadd.f32 0.0, %v1555
  %v1557 = vpop.f32.mrb[0].mxu0
  %v1558 = vadd.f32 0.0, %v1557
  %1559 = vdwg.mxu0
  %v1560 = vadd.f32 %v1437, %v1532
  %v1561 = vadd.f32 %v1439, %v1534
  %v1562 = vadd.f32 %v1443, %v1538
  %v1563 = vadd.f32 %v1445, %v1540
  %v1564 = vadd.f32 %v1449, %v1544
  %v1565 = vadd.f32 %v1451, %v1546
  %v1566 = vadd.f32 %v1455, %v1550
  %v1567 = vadd.f32 %v1457, %v1552
  %v1568 = vadd.f32 %v1461, %v1556
  %v1569 = vadd.f32 %v1463, %v1558
  %1570 = vmatprep.subr.mxu0 %v998
  %1571 = vmatpush1.msra.mxu0 %v997
  %1572 = vmatprep.subr.mxu0 %v1000
  %1573 = vmatpush1.msra.mxu0 %v999
  %1574 = vmatprep.subr.mxu0 %v1002
  %1575 = vmatpush1.msra.mxu0 %v1001
  %1576 = vmatprep.subr.mxu0 %v1004
  %1577 = vmatpush1.msra.mxu0 %v1003
  %1578 = vmatprep.subr.mxu0 %v1006
  %1579 = vmatpush1.msra.mxu0 %v1005
  %1580 = vmatprep.subr.mxu0 %v1008
  %1581 = vmatpush1.msra.mxu0 %v1007
  %1582 = vmatprep.subr.mxu0 %v1010
  %1583 = vmatpush1.msra.mxu0 %v1009
  %1584 = vmatprep.subr.mxu0 %v1012
  %1585 = vmatpush1.msra.mxu0 %v1011
  %1586 = vmatprep.subr.mxu0 %v1014
  %1587 = vmatpush1.msra.mxu0 %v1013
  %1588 = vmatprep.subr.mxu0 %v1016
  %1589 = vmatpush1.msra.mxu0 %v1015
  %1590 = vmatprep.subr.mxu0 %v1026
  %1591 = vmatpush1.msra.mxu0 %v1023
  %1592 = vmatprep.subr.mxu0 0.0
  %1593 = vmatpush1.msra.mxu0 0.0
  %1594 = vmatprep.subr.mxu0 0.0
  %1595 = vmatpush1.msra.mxu0 0.0
  %1596 = vmatprep.subr.mxu0 0.0
  %1597 = vmatpush1.msra.mxu0 0.0
  %1598 = vmatprep.subr.mxu0 0.0
  %1599 = vmatpush1.msra.mxu0 0.0
  %1600 = vmatprep.subr.mxu0 0.0
  %1601 = vmatpush1.msra.mxu0 0.0
  %1602 = vmatprep.subr.mxu0 0.0
  %1603 = vmatpush1.msra.mxu0 0.0
  %1604 = vmatprep.subr.mxu0 0.0
  %1605 = vmatpush1.msra.mxu0 0.0
  %1606 = vmatprep.subr.mxu0 0.0
  %1607 = vmatpush1.msra.mxu0 0.0
  %1608 = vmatprep.subr.mxu0 0.0
  %1609 = vmatpush1.msra.mxu0 0.0
  %1610 = vmatprep.subr.mxu0 0.0
  %1611 = vmatpush1.msra.mxu0 0.0
  %1612 = vmatprep.subr.mxu0 0.0
  %1613 = vmatpush1.msra.mxu0 0.0
  %1614 = vmatprep.subr.mxu0 0.0
  %1615 = vmatpush1.msra.mxu0 0.0
  %1616 = vmatprep.subr.mxu0 0.0
  %1617 = vmatpush1.msra.mxu0 0.0
  %1618 = vmatprep.subr.mxu0 0.0
  %1619 = vmatpush1.msra.mxu0 0.0
  %1620 = vmatprep.subr.mxu0 0.0
  %1621 = vmatpush1.msra.mxu0 0.0
  %1622 = vmatprep.subr.mxu0 0.0
  %1623 = vmatpush1.msra.mxu0 0.0
  %1624 = vmatprep.subr.mxu0 0.0
  %1625 = vmatpush1.msra.mxu0 0.0
  %1626 = vmatprep.subr.mxu0 0.0
  %1627 = vmatpush1.msra.mxu0 0.0
  %1628 = vmatprep.subr.mxu0 0.0
  %1629 = vmatpush1.msra.mxu0 0.0
  %1630 = vmatprep.subr.mxu0 0.0
  %1631 = vmatpush1.msra.mxu0 0.0
  %1632 = vmatprep.subr.mxu0 0.0
  %1633 = vmatpush1.msra.mxu0 0.0
  %1634 = vmatprep.mubr.f32.mxu0 0.0
  %1635 = vmatmul.mubr.f32.gmra.mrb[0].mxu0 %v750
  %v1636 = vpop.f32.mrb[0].mxu0
  %v1637 = vadd.f32 0.0, %v1636
  %v1638 = vpop.f32.mrb[0].mxu0
  %v1639 = vadd.f32 0.0, %v1638
  %1640 = vmatprep.mubr.f32.mxu0 0.0
  %1641 = vmatmul.mubr.f32.gmra.mrb[0].mxu0 %v753
  %v1642 = vpop.f32.mrb[0].mxu0
  %v1643 = vadd.f32 0.0, %v1642
  %v1644 = vpop.f32.mrb[0].mxu0
  %v1645 = vadd.f32 0.0, %v1644
  %1646 = vmatprep.mubr.f32.mxu0 0.0
  %1647 = vmatmul.mubr.f32.gmra.mrb[0].mxu0 %v756
  %v1648 = vpop.f32.mrb[0].mxu0
  %v1649 = vadd.f32 0.0, %v1648
  %v1650 = vpop.f32.mrb[0].mxu0
  %v1651 = vadd.f32 0.0, %v1650
  %1652 = vmatprep.mubr.f32.mxu0 0.0
  %1653 = vmatmul.mubr.f32.gmra.mrb[0].mxu0 %v883
  %v1654 = vpop.f32.mrb[0].mxu0
  %v1655 = vadd.f32 0.0, %v1654
  %v1656 = vpop.f32.mrb[0].mxu0
  %v1657 = vadd.f32 0.0, %v1656
  %1658 = vmatprep.mubr.f32.mxu0 0.0
  %1659 = vmatmul.mubr.f32.gmra.mrb[0].mxu0 %v1157
  %v1660 = vpop.f32.mrb[0].mxu0
  %v1661 = vadd.f32 0.0, %v1660
  %v1662 = vpop.f32.mrb[0].mxu0
  %v1663 = vadd.f32 0.0, %v1662
  %1664 = vdwg.mxu0
  %v1665 = vadd.f32 %v1560, %v1637
  %v1666 = vadd.f32 %v1561, %v1639
  %v1667 = vadd.f32 %v1562, %v1643
  %v1668 = vadd.f32 %v1563, %v1645
  %v1669 = vadd.f32 %v1564, %v1649
  %v1670 = vadd.f32 %v1565, %v1651
  %v1671 = vadd.f32 %v1566, %v1655
  %v1672 = vadd.f32 %v1567, %v1657
  %v1673 = vadd.f32 %v1568, %v1661
  %v1674 = vadd.f32 %v1569, %v1663
  %v1676 = vsel %vm625, %v579, 0
  %1678 = vmatprep.subr.mxu0 %v1135
  %1679 = vmatpush1.msra.mxu0 %v1134
  %1680 = vmatprep.subr.mxu0 %v1137
  %1681 = vmatpush1.msra.mxu0 %v1136
  %1682 = vmatprep.subr.mxu0 %v1139
  %1683 = vmatpush1.msra.mxu0 %v1138
  %1684 = vmatprep.subr.mxu0 %v1141
  %1685 = vmatpush1.msra.mxu0 %v1140
  %1686 = vmatprep.subr.mxu0 %v1143
  %1687 = vmatpush1.msra.mxu0 %v1142
  %1688 = vmatprep.subr.mxu0 %v1145
  %1689 = vmatpush1.msra.mxu0 %v1144
  %1690 = vmatprep.subr.mxu0 %v1147
  %1691 = vmatpush1.msra.mxu0 %v1146
  %1692 = vmatprep.subr.mxu0 %v1149
  %1693 = vmatpush1.msra.mxu0 %v1148
  %1694 = vmatprep.subr.mxu0 %v1151
  %1695 = vmatpush1.msra.mxu0 %v1150
  %1696 = vmatprep.subr.mxu0 %v1153
  %1697 = vmatpush1.msra.mxu0 %v1152
  %1698 = vmatprep.subr.mxu0 %v1163
  %1699 = vmatpush1.msra.mxu0 %v1160
  %1700 = vmatprep.subr.mxu0 0.0
  %1701 = vmatpush1.msra.mxu0 0.0
  %1702 = vmatprep.subr.mxu0 0.0
  %1703 = vmatpush1.msra.mxu0 0.0
  %1704 = vmatprep.subr.mxu0 0.0
  %1705 = vmatpush1.msra.mxu0 0.0
  %1706 = vmatprep.subr.mxu0 0.0
  %1707 = vmatpush1.msra.mxu0 0.0
  %1708 = vmatprep.subr.mxu0 0.0
  %1709 = vmatpush1.msra.mxu0 0.0
  %1710 = vmatprep.subr.mxu0 0.0
  %1711 = vmatpush1.msra.mxu0 0.0
  %1712 = vmatprep.subr.mxu0 0.0
  %1713 = vmatpush1.msra.mxu0 0.0
  %1714 = vmatprep.subr.mxu0 0.0
  %1715 = vmatpush1.msra.mxu0 0.0
  %1716 = vmatprep.subr.mxu0 0.0
  %1717 = vmatpush1.msra.mxu0 0.0
  %1718 = vmatprep.subr.mxu0 0.0
  %1719 = vmatpush1.msra.mxu0 0.0
  %1720 = vmatprep.subr.mxu0 0.0
  %1721 = vmatpush1.msra.mxu0 0.0
  %1722 = vmatprep.subr.mxu0 0.0
  %1723 = vmatpush1.msra.mxu0 0.0
  %1724 = vmatprep.subr.mxu0 0.0
  %1725 = vmatpush1.msra.mxu0 0.0
  %1726 = vmatprep.subr.mxu0 0.0
  %1727 = vmatpush1.msra.mxu0 0.0
  %1728 = vmatprep.subr.mxu0 0.0
  %1729 = vmatpush1.msra.mxu0 0.0
  %1730 = vmatprep.subr.mxu0 0.0
  %1731 = vmatpush1.msra.mxu0 0.0
  %1732 = vmatprep.subr.mxu0 0.0
  %1733 = vmatpush1.msra.mxu0 0.0
  %1734 = vmatprep.subr.mxu0 0.0
  %1735 = vmatpush1.msra.mxu0 0.0
  %1736 = vmatprep.subr.mxu0 0.0
  %1737 = vmatpush1.msra.mxu0 0.0
  %1738 = vmatprep.subr.mxu0 0.0
  %1739 = vmatpush1.msra.mxu0 0.0
  %1740 = vmatprep.subr.mxu0 0.0
  %1741 = vmatpush1.msra.mxu0 0.0
  %1742 = vmatprep.mubr.f32.mxu0 0.0
  %1743 = vmatmul.mubr.f32.gmra.mrb[0].mxu0 %v633
  %v1744 = vpop.f32.mrb[0].mxu0
  %v1745 = vadd.f32 0.0, %v1744
  %v1746 = vpop.f32.mrb[0].mxu0
  %v1747 = vadd.f32 0.0, %v1746
  %1748 = vmatprep.mubr.f32.mxu0 0.0
  %1749 = vmatmul.mubr.f32.gmra.mrb[0].mxu0 %v636
  %v1750 = vpop.f32.mrb[0].mxu0
  %v1751 = vadd.f32 0.0, %v1750
  %v1752 = vpop.f32.mrb[0].mxu0
  %v1753 = vadd.f32 0.0, %v1752
  %1754 = vmatprep.mubr.f32.mxu0 0.0
  %1755 = vmatmul.mubr.f32.gmra.mrb[0].mxu0 %v639
  %v1756 = vpop.f32.mrb[0].mxu0
  %v1757 = vadd.f32 0.0, %v1756
  %v1758 = vpop.f32.mrb[0].mxu0
  %v1759 = vadd.f32 0.0, %v1758
  %1760 = vmatprep.mubr.f32.mxu0 0.0
  %1761 = vmatmul.mubr.f32.gmra.mrb[0].mxu0 %v1020
  %v1762 = vpop.f32.mrb[0].mxu0
  %v1763 = vadd.f32 0.0, %v1762
  %v1764 = vpop.f32.mrb[0].mxu0
  %v1765 = vadd.f32 0.0, %v1764
  %1766 = vmatprep.mubr.f32.mxu0 0.0
  %1767 = vmatmul.mubr.f32.gmra.mrb[0].mxu0 %v1676
  %v1768 = vpop.f32.mrb[0].mxu0
  %v1769 = vadd.f32 0.0, %v1768
  %v1770 = vpop.f32.mrb[0].mxu0
  %v1771 = vadd.f32 0.0, %v1770
  %1772 = vdwg.mxu0
  %v1773 = vadd.f32 %v1665, %v1745
  %v1774 = vadd.f32 %v1666, %v1747
  %v1775 = vadd.f32 %v1667, %v1751
  %v1776 = vadd.f32 %v1668, %v1753
  %v1777 = vadd.f32 %v1669, %v1757
  %v1778 = vadd.f32 %v1670, %v1759
  %v1779 = vadd.f32 %v1671, %v1763
  %v1780 = vadd.f32 %v1672, %v1765
  %v1781 = vadd.f32 %v1673, %v1769
  %v1782 = vadd.f32 %v1674, %v1771
  %v1783 = vmax.f32 %v1773, %v1774
  %v1784 = vmax.f32 %v1775, %v1776
  %v1785 = vmax.f32 %v1777, %v1778
  %v1786 = vmax.f32 %v1779, %v1780
  %v1787 = vmax.f32 %v1781, %v1782
  %v1788 = vmax.f32 %v1270, %v1783
  %v1789 = vmax.f32 %v1271, %v1784
  %v1790 = vmax.f32 %v1272, %v1785
  %v1791 = vmax.f32 %v1273, %v1786
  %v1792 = vmax.f32 %v1274, %v1787
  %v1793 = vld [vmem:[%s4] sm:$0x1]
  %v1795 = vlaneseq
  %v1796 = vshrl.u32 %v1795, 7
  %v1797 = vsub.s32 0, %v1796
  %v1798 = vrot.slane %v1793, %v1797
  %v1800 = vadd.f32 %v1788, %v1798
  %v1801 = vadd.f32 %v1789, %v1798
  %v1802 = vadd.f32 %v1790, %v1798
  %v1803 = vadd.f32 %v1791, %v1798
  %v1804 = vadd.f32 %v1792, %v1798
  %v1805 = vmax.f32 %v1800, 0.0
  %v1806 = vmax.f32 %v1801, 0.0
  %v1807 = vmax.f32 %v1802, 0.0
  %v1808 = vmax.f32 %v1803, 0.0
  %v1809 = vmax.f32 %v1804, 0.0
  %v1810 = vld [vmem:[%s5] sm:$0xff]
  %v1811 = vld [vmem:[%s5 + $0x8] sm:$0xff]
  %v1812 = vld [vmem:[%s5 + $0x10] sm:$0xff]
  %v1813 = vld [vmem:[%s5 + $0x18] sm:$0xff]
  %v1814 = vld [vmem:[%s5 + $0x20] sm:$0xff]
  %v1815 = vld [vmem:[%s5 + $0x28] sm:$0xff]
  %v1816 = vld [vmem:[%s5 + $0x30] sm:$0xff]
  %v1817 = vld [vmem:[%s5 + $0x38] sm:$0xff]
  %v1818 = vld [vmem:[%s5 + $0x40] sm:$0xff]
  %v1819 = vld [vmem:[%s5 + $0x48] sm:$0xff]
  %s1820 = scalar_lea.vmem %s5, 80
  %v1821 = vld [vmem:[%s1820] sm:$0xff]
  %v1822 = vld [vmem:[%s1820 + $0x8] sm:$0xff]
  %v1823 = vld [vmem:[%s1820 + $0x10] sm:$0xff]
  %v1824 = vld [vmem:[%s1820 + $0x18] sm:$0xff]
  %v1825 = vld [vmem:[%s1820 + $0x20] sm:$0xff]
  %v1826 = vld [vmem:[%s1820 + $0x28] sm:$0xff]
  %v1827 = vld [vmem:[%s1820 + $0x30] sm:$0xff]
  %v1828 = vld [vmem:[%s1820 + $0x38] sm:$0xff]
  %v1829 = vld [vmem:[%s1820 + $0x40] sm:$0xff]
  %v1830 = vld [vmem:[%s1820 + $0x48] sm:$0xff]
  %vm1831 = vcmask 654336
  %v1833 = vsel %vm1831, %v1806, 0
  %1835 = vmatprep.subr.mxu0 0.0
  %1836 = vmatpush1.msra.mxu0 %v1821
  %1837 = vmatprep.subr.mxu0 0.0
  %1838 = vmatpush1.msra.mxu0 %v1822
  %1839 = vmatprep.subr.mxu0 0.0
  %1840 = vmatpush1.msra.mxu0 %v1823
  %1841 = vmatprep.subr.mxu0 0.0
  %1842 = vmatpush1.msra.mxu0 %v1824
  %1843 = vmatprep.subr.mxu0 0.0
  %1844 = vmatpush1.msra.mxu0 %v1825
  %1845 = vmatprep.subr.mxu0 0.0
  %1846 = vmatpush1.msra.mxu0 %v1826
  %1847 = vmatprep.subr.mxu0 0.0
  %1848 = vmatpush1.msra.mxu0 %v1827
  %1849 = vmatprep.subr.mxu0 0.0
  %1850 = vmatpush1.msra.mxu0 %v1828
  %1851 = vmatprep.subr.mxu0 0.0
  %1852 = vmatpush1.msra.mxu0 %v1829
  %1853 = vmatprep.subr.mxu0 0.0
  %1854 = vmatpush1.msra.mxu0 %v1830
  %1855 = vmatprep.subr.mxu0 0.0
  %1856 = vmatpush1.msra.mxu0 0.0
  %1857 = vmatprep.subr.mxu0 0.0
  %1858 = vmatpush1.msra.mxu0 0.0
  %1859 = vmatprep.subr.mxu0 0.0
  %1860 = vmatpush1.msra.mxu0 0.0
  %1861 = vmatprep.subr.mxu0 0.0
  %1862 = vmatpush1.msra.mxu0 0.0
  %1863 = vmatprep.subr.mxu0 0.0
  %1864 = vmatpush1.msra.mxu0 0.0
  %1865 = vmatprep.subr.mxu0 0.0
  %1866 = vmatpush1.msra.mxu0 0.0
  %1867 = vmatprep.subr.mxu0 0.0
  %1868 = vmatpush1.msra.mxu0 0.0
  %1869 = vmatprep.subr.mxu0 0.0
  %1870 = vmatpush1.msra.mxu0 0.0
  %1871 = vmatprep.subr.mxu0 0.0
  %1872 = vmatpush1.msra.mxu0 0.0
  %1873 = vmatprep.subr.mxu0 0.0
  %1874 = vmatpush1.msra.mxu0 0.0
  %1875 = vmatprep.subr.mxu0 0.0
  %1876 = vmatpush1.msra.mxu0 0.0
  %1877 = vmatprep.subr.mxu0 0.0
  %1878 = vmatpush1.msra.mxu0 0.0
  %1879 = vmatprep.subr.mxu0 0.0
  %1880 = vmatpush1.msra.mxu0 0.0
  %1881 = vmatprep.subr.mxu0 0.0
  %1882 = vmatpush1.msra.mxu0 0.0
  %1883 = vmatprep.subr.mxu0 0.0
  %1884 = vmatpush1.msra.mxu0 0.0
  %1885 = vmatprep.subr.mxu0 0.0
  %1886 = vmatpush1.msra.mxu0 0.0
  %1887 = vmatprep.subr.mxu0 0.0
  %1888 = vmatpush1.msra.mxu0 0.0
  %1889 = vmatprep.subr.mxu0 0.0
  %1890 = vmatpush1.msra.mxu0 0.0
  %1891 = vmatprep.subr.mxu0 0.0
  %1892 = vmatpush1.msra.mxu0 0.0
  %1893 = vmatprep.subr.mxu0 0.0
  %1894 = vmatpush1.msra.mxu0 0.0
  %1895 = vmatprep.subr.mxu0 0.0
  %1896 = vmatpush1.msra.mxu0 0.0
  %1897 = vmatprep.subr.mxu0 0.0
  %1898 = vmatpush1.msra.mxu0 0.0
  %1899 = vmatprep.mubr.f32.mxu0 0.0
  %1900 = vmatmul.mubr.f32.gmra.mrb[0].mxu0 %v1833
  %v1901 = vpop.f32.mrb[0].mxu0
  %v1902 = vadd.f32 0.0, %v1901
  %v1903 = vpop.f32.mrb[0].mxu0
  %1904 = vdwg.mxu0
  %v1906 = vsel %vm1831, %v1805, 0
  %1908 = vmatprep.subr.mxu0 0.0
  %1909 = vmatpush1.msra.mxu0 %v1810
  %1910 = vmatprep.subr.mxu0 0.0
  %1911 = vmatpush1.msra.mxu0 %v1811
  %1912 = vmatprep.subr.mxu0 0.0
  %1913 = vmatpush1.msra.mxu0 %v1812
  %1914 = vmatprep.subr.mxu0 0.0
  %1915 = vmatpush1.msra.mxu0 %v1813
  %1916 = vmatprep.subr.mxu0 0.0
  %1917 = vmatpush1.msra.mxu0 %v1814
  %1918 = vmatprep.subr.mxu0 0.0
  %1919 = vmatpush1.msra.mxu0 %v1815
  %1920 = vmatprep.subr.mxu0 0.0
  %1921 = vmatpush1.msra.mxu0 %v1816
  %1922 = vmatprep.subr.mxu0 0.0
  %1923 = vmatpush1.msra.mxu0 %v1817
  %1924 = vmatprep.subr.mxu0 0.0
  %1925 = vmatpush1.msra.mxu0 %v1818
  %1926 = vmatprep.subr.mxu0 0.0
  %1927 = vmatpush1.msra.mxu0 %v1819
  %1928 = vmatprep.subr.mxu0 0.0
  %1929 = vmatpush1.msra.mxu0 0.0
  %1930 = vmatprep.subr.mxu0 0.0
  %1931 = vmatpush1.msra.mxu0 0.0
  %1932 = vmatprep.subr.mxu0 0.0
  %1933 = vmatpush1.msra.mxu0 0.0
  %1934 = vmatprep.subr.mxu0 0.0
  %1935 = vmatpush1.msra.mxu0 0.0
  %1936 = vmatprep.subr.mxu0 0.0
  %1937 = vmatpush1.msra.mxu0 0.0
  %1938 = vmatprep.subr.mxu0 0.0
  %1939 = vmatpush1.msra.mxu0 0.0
  %1940 = vmatprep.subr.mxu0 0.0
  %1941 = vmatpush1.msra.mxu0 0.0
  %1942 = vmatprep.subr.mxu0 0.0
  %1943 = vmatpush1.msra.mxu0 0.0
  %1944 = vmatprep.subr.mxu0 0.0
  %1945 = vmatpush1.msra.mxu0 0.0
  %1946 = vmatprep.subr.mxu0 0.0
  %1947 = vmatpush1.msra.mxu0 0.0
  %1948 = vmatprep.subr.mxu0 0.0
  %1949 = vmatpush1.msra.mxu0 0.0
  %1950 = vmatprep.subr.mxu0 0.0
  %1951 = vmatpush1.msra.mxu0 0.0
  %1952 = vmatprep.subr.mxu0 0.0
  %1953 = vmatpush1.msra.mxu0 0.0
  %1954 = vmatprep.subr.mxu0 0.0
  %1955 = vmatpush1.msra.mxu0 0.0
  %1956 = vmatprep.subr.mxu0 0.0
  %1957 = vmatpush1.msra.mxu0 0.0
  %1958 = vmatprep.subr.mxu0 0.0
  %1959 = vmatpush1.msra.mxu0 0.0
  %1960 = vmatprep.subr.mxu0 0.0
  %1961 = vmatpush1.msra.mxu0 0.0
  %1962 = vmatprep.subr.mxu0 0.0
  %1963 = vmatpush1.msra.mxu0 0.0
  %1964 = vmatprep.subr.mxu0 0.0
  %1965 = vmatpush1.msra.mxu0 0.0
  %1966 = vmatprep.subr.mxu0 0.0
  %1967 = vmatpush1.msra.mxu0 0.0
  %1968 = vmatprep.subr.mxu0 0.0
  %1969 = vmatpush1.msra.mxu0 0.0
  %1970 = vmatprep.subr.mxu0 0.0
  %1971 = vmatpush1.msra.mxu0 0.0
  %1972 = vmatprep.mubr.f32.mxu0 0.0
  %1973 = vmatmul.mubr.f32.gmra.mrb[0].mxu0 %v1906
  %v1974 = vpop.f32.mrb[0].mxu0
  %v1975 = vadd.f32 %v1902, %v1974
  %v1976 = vpop.f32.mrb[0].mxu0
  %1977 = vdwg.mxu0
  %s1978 = scalar_lea.vmem %s5, 160
  %v1979 = vld [vmem:[%s1978] sm:$0xff]
  %v1980 = vld [vmem:[%s1978 + $0x8] sm:$0xff]
  %v1981 = vld [vmem:[%s1978 + $0x10] sm:$0xff]
  %v1982 = vld [vmem:[%s1978 + $0x18] sm:$0xff]
  %v1983 = vld [vmem:[%s1978 + $0x20] sm:$0xff]
  %v1984 = vld [vmem:[%s1978 + $0x28] sm:$0xff]
  %v1985 = vld [vmem:[%s1978 + $0x30] sm:$0xff]
  %v1986 = vld [vmem:[%s1978 + $0x38] sm:$0xff]
  %v1987 = vld [vmem:[%s1978 + $0x40] sm:$0xff]
  %v1988 = vld [vmem:[%s1978 + $0x48] sm:$0xff]
  %v1990 = vsel %vm1831, %v1807, 0
  %1992 = vmatprep.subr.mxu0 0.0
  %1993 = vmatpush1.msra.mxu0 %v1979
  %1994 = vmatprep.subr.mxu0 0.0
  %1995 = vmatpush1.msra.mxu0 %v1980
  %1996 = vmatprep.subr.mxu0 0.0
  %1997 = vmatpush1.msra.mxu0 %v1981
  %1998 = vmatprep.subr.mxu0 0.0
  %1999 = vmatpush1.msra.mxu0 %v1982
  %2000 = vmatprep.subr.mxu0 0.0
  %2001 = vmatpush1.msra.mxu0 %v1983
  %2002 = vmatprep.subr.mxu0 0.0
  %2003 = vmatpush1.msra.mxu0 %v1984
  %2004 = vmatprep.subr.mxu0 0.0
  %2005 = vmatpush1.msra.mxu0 %v1985
  %2006 = vmatprep.subr.mxu0 0.0
  %2007 = vmatpush1.msra.mxu0 %v1986
  %2008 = vmatprep.subr.mxu0 0.0
  %2009 = vmatpush1.msra.mxu0 %v1987
  %2010 = vmatprep.subr.mxu0 0.0
  %2011 = vmatpush1.msra.mxu0 %v1988
  %2012 = vmatprep.subr.mxu0 0.0
  %2013 = vmatpush1.msra.mxu0 0.0
  %2014 = vmatprep.subr.mxu0 0.0
  %2015 = vmatpush1.msra.mxu0 0.0
  %2016 = vmatprep.subr.mxu0 0.0
  %2017 = vmatpush1.msra.mxu0 0.0
  %2018 = vmatprep.subr.mxu0 0.0
  %2019 = vmatpush1.msra.mxu0 0.0
  %2020 = vmatprep.subr.mxu0 0.0
  %2021 = vmatpush1.msra.mxu0 0.0
  %2022 = vmatprep.subr.mxu0 0.0
  %2023 = vmatpush1.msra.mxu0 0.0
  %2024 = vmatprep.subr.mxu0 0.0
  %2025 = vmatpush1.msra.mxu0 0.0
  %2026 = vmatprep.subr.mxu0 0.0
  %2027 = vmatpush1.msra.mxu0 0.0
  %2028 = vmatprep.subr.mxu0 0.0
  %2029 = vmatpush1.msra.mxu0 0.0
  %2030 = vmatprep.subr.mxu0 0.0
  %2031 = vmatpush1.msra.mxu0 0.0
  %2032 = vmatprep.subr.mxu0 0.0
  %2033 = vmatpush1.msra.mxu0 0.0
  %2034 = vmatprep.subr.mxu0 0.0
  %2035 = vmatpush1.msra.mxu0 0.0
  %2036 = vmatprep.subr.mxu0 0.0
  %2037 = vmatpush1.msra.mxu0 0.0
  %2038 = vmatprep.subr.mxu0 0.0
  %2039 = vmatpush1.msra.mxu0 0.0
  %2040 = vmatprep.subr.mxu0 0.0
  %2041 = vmatpush1.msra.mxu0 0.0
  %2042 = vmatprep.subr.mxu0 0.0
  %2043 = vmatpush1.msra.mxu0 0.0
  %2044 = vmatprep.subr.mxu0 0.0
  %2045 = vmatpush1.msra.mxu0 0.0
  %2046 = vmatprep.subr.mxu0 0.0
  %2047 = vmatpush1.msra.mxu0 0.0
  %2048 = vmatprep.subr.mxu0 0.0
  %2049 = vmatpush1.msra.mxu0 0.0
  %2050 = vmatprep.subr.mxu0 0.0
  %2051 = vmatpush1.msra.mxu0 0.0
  %2052 = vmatprep.subr.mxu0 0.0
  %2053 = vmatpush1.msra.mxu0 0.0
  %2054 = vmatprep.subr.mxu0 0.0
  %2055 = vmatpush1.msra.mxu0 0.0
  %2056 = vmatprep.mubr.f32.mxu0 0.0
  %2057 = vmatmul.mubr.f32.gmra.mrb[0].mxu0 %v1990
  %v2058 = vpop.f32.mrb[0].mxu0
  %v2059 = vadd.f32 0.0, %v2058
  %v2060 = vpop.f32.mrb[0].mxu0
  %2061 = vdwg.mxu0
  %v2062 = vadd.f32 %v1975, %v2059
  %s2063 = scalar_lea.vmem %s5, 240
  %v2064 = vld [vmem:[%s2063] sm:$0xff]
  %v2065 = vld [vmem:[%s2063 + $0x8] sm:$0xff]
  %v2066 = vld [vmem:[%s2063 + $0x10] sm:$0xff]
  %v2067 = vld [vmem:[%s2063 + $0x18] sm:$0xff]
  %v2068 = vld [vmem:[%s2063 + $0x20] sm:$0xff]
  %v2069 = vld [vmem:[%s2063 + $0x28] sm:$0xff]
  %v2070 = vld [vmem:[%s2063 + $0x30] sm:$0xff]
  %v2071 = vld [vmem:[%s2063 + $0x38] sm:$0xff]
  %v2072 = vld [vmem:[%s2063 + $0x40] sm:$0xff]
  %v2073 = vld [vmem:[%s2063 + $0x48] sm:$0xff]
  %v2075 = vsel %vm1831, %v1808, 0
  %2077 = vmatprep.subr.mxu0 0.0
  %2078 = vmatpush1.msra.mxu0 %v2064
  %2079 = vmatprep.subr.mxu0 0.0
  %2080 = vmatpush1.msra.mxu0 %v2065
  %2081 = vmatprep.subr.mxu0 0.0
  %2082 = vmatpush1.msra.mxu0 %v2066
  %2083 = vmatprep.subr.mxu0 0.0
  %2084 = vmatpush1.msra.mxu0 %v2067
  %2085 = vmatprep.subr.mxu0 0.0
  %2086 = vmatpush1.msra.mxu0 %v2068
  %2087 = vmatprep.subr.mxu0 0.0
  %2088 = vmatpush1.msra.mxu0 %v2069
  %2089 = vmatprep.subr.mxu0 0.0
  %2090 = vmatpush1.msra.mxu0 %v2070
  %2091 = vmatprep.subr.mxu0 0.0
  %2092 = vmatpush1.msra.mxu0 %v2071
  %2093 = vmatprep.subr.mxu0 0.0
  %2094 = vmatpush1.msra.mxu0 %v2072
  %2095 = vmatprep.subr.mxu0 0.0
  %2096 = vmatpush1.msra.mxu0 %v2073
  %2097 = vmatprep.subr.mxu0 0.0
  %2098 = vmatpush1.msra.mxu0 0.0
  %2099 = vmatprep.subr.mxu0 0.0
  %2100 = vmatpush1.msra.mxu0 0.0
  %2101 = vmatprep.subr.mxu0 0.0
  %2102 = vmatpush1.msra.mxu0 0.0
  %2103 = vmatprep.subr.mxu0 0.0
  %2104 = vmatpush1.msra.mxu0 0.0
  %2105 = vmatprep.subr.mxu0 0.0
  %2106 = vmatpush1.msra.mxu0 0.0
  %2107 = vmatprep.subr.mxu0 0.0
  %2108 = vmatpush1.msra.mxu0 0.0
  %2109 = vmatprep.subr.mxu0 0.0
  %2110 = vmatpush1.msra.mxu0 0.0
  %2111 = vmatprep.subr.mxu0 0.0
  %2112 = vmatpush1.msra.mxu0 0.0
  %2113 = vmatprep.subr.mxu0 0.0
  %2114 = vmatpush1.msra.mxu0 0.0
  %2115 = vmatprep.subr.mxu0 0.0
  %2116 = vmatpush1.msra.mxu0 0.0
  %2117 = vmatprep.subr.mxu0 0.0
  %2118 = vmatpush1.msra.mxu0 0.0
  %2119 = vmatprep.subr.mxu0 0.0
  %2120 = vmatpush1.msra.mxu0 0.0
  %2121 = vmatprep.subr.mxu0 0.0
  %2122 = vmatpush1.msra.mxu0 0.0
  %2123 = vmatprep.subr.mxu0 0.0
  %2124 = vmatpush1.msra.mxu0 0.0
  %2125 = vmatprep.subr.mxu0 0.0
  %2126 = vmatpush1.msra.mxu0 0.0
  %2127 = vmatprep.subr.mxu0 0.0
  %2128 = vmatpush1.msra.mxu0 0.0
  %2129 = vmatprep.subr.mxu0 0.0
  %2130 = vmatpush1.msra.mxu0 0.0
  %2131 = vmatprep.subr.mxu0 0.0
  %2132 = vmatpush1.msra.mxu0 0.0
  %2133 = vmatprep.subr.mxu0 0.0
  %2134 = vmatpush1.msra.mxu0 0.0
  %2135 = vmatprep.subr.mxu0 0.0
  %2136 = vmatpush1.msra.mxu0 0.0
  %2137 = vmatprep.subr.mxu0 0.0
  %2138 = vmatpush1.msra.mxu0 0.0
  %2139 = vmatprep.subr.mxu0 0.0
  %2140 = vmatpush1.msra.mxu0 0.0
  %2141 = vmatprep.mubr.f32.mxu0 0.0
  %2142 = vmatmul.mubr.f32.gmra.mrb[0].mxu0 %v2075
  %v2143 = vpop.f32.mrb[0].mxu0
  %v2144 = vadd.f32 0.0, %v2143
  %v2145 = vpop.f32.mrb[0].mxu0
  %2146 = vdwg.mxu0
  %v2147 = vadd.f32 %v2062, %v2144
  %s2148 = scalar_lea.vmem %s5, 320
  %v2149 = vld [vmem:[%s2148] sm:$0xff]
  %v2150 = vld [vmem:[%s2148 + $0x8] sm:$0xff]
  %v2151 = vld [vmem:[%s2148 + $0x10] sm:$0xff]
  %v2152 = vld [vmem:[%s2148 + $0x18] sm:$0xff]
  %v2153 = vld [vmem:[%s2148 + $0x20] sm:$0xff]
  %v2154 = vld [vmem:[%s2148 + $0x28] sm:$0xff]
  %v2155 = vld [vmem:[%s2148 + $0x30] sm:$0xff]
  %v2156 = vld [vmem:[%s2148 + $0x38] sm:$0xff]
  %v2157 = vld [vmem:[%s2148 + $0x40] sm:$0xff]
  %v2158 = vld [vmem:[%s2148 + $0x48] sm:$0xff]
  %v2160 = vsel %vm1831, %v1809, 0
  %2162 = vmatprep.subr.mxu0 0.0
  %2163 = vmatpush1.msra.mxu0 %v2149
  %2164 = vmatprep.subr.mxu0 0.0
  %2165 = vmatpush1.msra.mxu0 %v2150
  %2166 = vmatprep.subr.mxu0 0.0
  %2167 = vmatpush1.msra.mxu0 %v2151
  %2168 = vmatprep.subr.mxu0 0.0
  %2169 = vmatpush1.msra.mxu0 %v2152
  %2170 = vmatprep.subr.mxu0 0.0
  %2171 = vmatpush1.msra.mxu0 %v2153
  %2172 = vmatprep.subr.mxu0 0.0
  %2173 = vmatpush1.msra.mxu0 %v2154
  %2174 = vmatprep.subr.mxu0 0.0
  %2175 = vmatpush1.msra.mxu0 %v2155
  %2176 = vmatprep.subr.mxu0 0.0
  %2177 = vmatpush1.msra.mxu0 %v2156
  %2178 = vmatprep.subr.mxu0 0.0
  %2179 = vmatpush1.msra.mxu0 %v2157
  %2180 = vmatprep.subr.mxu0 0.0
  %2181 = vmatpush1.msra.mxu0 %v2158
  %2182 = vmatprep.subr.mxu0 0.0
  %2183 = vmatpush1.msra.mxu0 0.0
  %2184 = vmatprep.subr.mxu0 0.0
  %2185 = vmatpush1.msra.mxu0 0.0
  %2186 = vmatprep.subr.mxu0 0.0
  %2187 = vmatpush1.msra.mxu0 0.0
  %2188 = vmatprep.subr.mxu0 0.0
  %2189 = vmatpush1.msra.mxu0 0.0
  %2190 = vmatprep.subr.mxu0 0.0
  %2191 = vmatpush1.msra.mxu0 0.0
  %2192 = vmatprep.subr.mxu0 0.0
  %2193 = vmatpush1.msra.mxu0 0.0
  %2194 = vmatprep.subr.mxu0 0.0
  %2195 = vmatpush1.msra.mxu0 0.0
  %2196 = vmatprep.subr.mxu0 0.0
  %2197 = vmatpush1.msra.mxu0 0.0
  %2198 = vmatprep.subr.mxu0 0.0
  %2199 = vmatpush1.msra.mxu0 0.0
  %2200 = vmatprep.subr.mxu0 0.0
  %2201 = vmatpush1.msra.mxu0 0.0
  %2202 = vmatprep.subr.mxu0 0.0
  %2203 = vmatpush1.msra.mxu0 0.0
  %2204 = vmatprep.subr.mxu0 0.0
  %2205 = vmatpush1.msra.mxu0 0.0
  %2206 = vmatprep.subr.mxu0 0.0
  %2207 = vmatpush1.msra.mxu0 0.0
  %2208 = vmatprep.subr.mxu0 0.0
  %2209 = vmatpush1.msra.mxu0 0.0
  %2210 = vmatprep.subr.mxu0 0.0
  %2211 = vmatpush1.msra.mxu0 0.0
  %2212 = vmatprep.subr.mxu0 0.0
  %2213 = vmatpush1.msra.mxu0 0.0
  %2214 = vmatprep.subr.mxu0 0.0
  %2215 = vmatpush1.msra.mxu0 0.0
  %2216 = vmatprep.subr.mxu0 0.0
  %2217 = vmatpush1.msra.mxu0 0.0
  %2218 = vmatprep.subr.mxu0 0.0
  %2219 = vmatpush1.msra.mxu0 0.0
  %2220 = vmatprep.subr.mxu0 0.0
  %2221 = vmatpush1.msra.mxu0 0.0
  %2222 = vmatprep.subr.mxu0 0.0
  %2223 = vmatpush1.msra.mxu0 0.0
  %2224 = vmatprep.subr.mxu0 0.0
  %2225 = vmatpush1.msra.mxu0 0.0
  %2226 = vmatprep.mubr.f32.mxu0 0.0
  %2227 = vmatmul.mubr.f32.gmra.mrb[0].mxu0 %v2160
  %v2228 = vpop.f32.mrb[0].mxu0
  %v2229 = vadd.f32 0.0, %v2228
  %v2230 = vpop.f32.mrb[0].mxu0
  %2231 = vdwg.mxu0
  %v2232 = vadd.f32 %v2147, %v2229
  %v2233 = vld [vmem:[%s6] sm:$0x1]
  %v2235 = vlaneseq
  %v2236 = vshrl.u32 %v2235, 7
  %v2237 = vsub.s32 0, %v2236
  %v2238 = vrot.slane %v2233, %v2237
  %v2240 = vadd.f32 %v2232, %v2238
  %v2241 = vmax.f32 %v2240, 0.0
  %v2242 = vld [vmem:[%s7] sm:$0xff]
  %v2243 = vld [vmem:[%s7 + $0x8] sm:$0xff]
  %v2244 = vld [vmem:[%s7 + $0x10] sm:$0xff]
  %v2245 = vld [vmem:[%s7 + $0x18] sm:$0xff]
  %v2246 = vld [vmem:[%s7 + $0x20] sm:$0xff]
  %v2247 = vld [vmem:[%s7 + $0x28] sm:$0xff]
  %v2248 = vld [vmem:[%s7 + $0x30] sm:$0xff]
  %v2249 = vld [vmem:[%s7 + $0x38] sm:$0xff]
  %v2250 = vld [vmem:[%s7 + $0x40] sm:$0xff]
  %v2251 = vld [vmem:[%s7 + $0x48] sm:$0xff]
  %v2252 = vld [vmem:[%s7 + $0x50] sm:$0xff]
  %v2253 = vld [vmem:[%s7 + $0x58] sm:$0xff]
  %v2254 = vld [vmem:[%s7 + $0x60] sm:$0xff]
  %v2255 = vld [vmem:[%s7 + $0x68] sm:$0xff]
  %v2256 = vld [vmem:[%s7 + $0x70] sm:$0xff]
  %v2257 = vld [vmem:[%s8] sm:$0x1]
  %v2259 = vlaneseq
  %v2260 = vshrl.u32 %v2259, 7
  %v2261 = vsub.s32 0, %v2260
  %v2262 = vrot.slane %v2257, %v2261
  %vm2264 = vcmask 982016
  %v2266 = vsel %vm2264, %v2241, 0
  %2268 = vmatprep.subr.mxu0 0.0
  %2269 = vmatpush1.msra.mxu0 %v2242
  %2270 = vmatprep.subr.mxu0 0.0
  %2271 = vmatpush1.msra.mxu0 %v2243
  %2272 = vmatprep.subr.mxu0 0.0
  %2273 = vmatpush1.msra.mxu0 %v2244
  %2274 = vmatprep.subr.mxu0 0.0
  %2275 = vmatpush1.msra.mxu0 %v2245
  %2276 = vmatprep.subr.mxu0 0.0
  %2277 = vmatpush1.msra.mxu0 %v2246
  %2278 = vmatprep.subr.mxu0 0.0
  %2279 = vmatpush1.msra.mxu0 %v2247
  %2280 = vmatprep.subr.mxu0 0.0
  %2281 = vmatpush1.msra.mxu0 %v2248
  %2282 = vmatprep.subr.mxu0 0.0
  %2283 = vmatpush1.msra.mxu0 %v2249
  %2284 = vmatprep.subr.mxu0 0.0
  %2285 = vmatpush1.msra.mxu0 %v2250
  %2286 = vmatprep.subr.mxu0 0.0
  %2287 = vmatpush1.msra.mxu0 %v2251
  %2288 = vmatprep.subr.mxu0 0.0
  %2289 = vmatpush1.msra.mxu0 %v2252
  %2290 = vmatprep.subr.mxu0 0.0
  %2291 = vmatpush1.msra.mxu0 %v2253
  %2292 = vmatprep.subr.mxu0 0.0
  %2293 = vmatpush1.msra.mxu0 %v2254
  %2294 = vmatprep.subr.mxu0 0.0
  %2295 = vmatpush1.msra.mxu0 %v2255
  %2296 = vmatprep.subr.mxu0 0.0
  %2297 = vmatpush1.msra.mxu0 %v2256
  %2298 = vmatprep.subr.mxu0 0.0
  %2299 = vmatpush1.msra.mxu0 0.0
  %2300 = vmatprep.subr.mxu0 0.0
  %2301 = vmatpush1.msra.mxu0 0.0
  %2302 = vmatprep.subr.mxu0 0.0
  %2303 = vmatpush1.msra.mxu0 0.0
  %2304 = vmatprep.subr.mxu0 0.0
  %2305 = vmatpush1.msra.mxu0 0.0
  %2306 = vmatprep.subr.mxu0 0.0
  %2307 = vmatpush1.msra.mxu0 0.0
  %2308 = vmatprep.subr.mxu0 0.0
  %2309 = vmatpush1.msra.mxu0 0.0
  %2310 = vmatprep.subr.mxu0 0.0
  %2311 = vmatpush1.msra.mxu0 0.0
  %2312 = vmatprep.subr.mxu0 0.0
  %2313 = vmatpush1.msra.mxu0 0.0
  %2314 = vmatprep.subr.mxu0 0.0
  %2315 = vmatpush1.msra.mxu0 0.0
  %2316 = vmatprep.subr.mxu0 0.0
  %2317 = vmatpush1.msra.mxu0 0.0
  %2318 = vmatprep.subr.mxu0 0.0
  %2319 = vmatpush1.msra.mxu0 0.0
  %2320 = vmatprep.subr.mxu0 0.0
  %2321 = vmatpush1.msra.mxu0 0.0
  %2322 = vmatprep.subr.mxu0 0.0
  %2323 = vmatpush1.msra.mxu0 0.0
  %2324 = vmatprep.subr.mxu0 0.0
  %2325 = vmatpush1.msra.mxu0 0.0
  %2326 = vmatprep.subr.mxu0 0.0
  %2327 = vmatpush1.msra.mxu0 0.0
  %2328 = vmatprep.subr.mxu0 0.0
  %2329 = vmatpush1.msra.mxu0 0.0
  %2330 = vmatprep.subr.mxu0 0.0
  %2331 = vmatpush1.msra.mxu0 0.0
  %2332 = vmatprep.mubr.f32.mxu0 0.0
  %2333 = vmatmul.mubr.f32.gmra.mrb[0].mxu0 %v2266
  %v2334 = vpop.f32.mrb[0].mxu0
  %v2335 = vadd.f32 %v2262, %v2334
  %v2336 = vpop.f32.mrb[0].mxu0
  %2337 = vdwg.mxu0
  %v2338 = vmax.f32 %v2335, 0.0
  %v2339 = vld [vmem:[%s9] sm:$0xff]
  %v2340 = vld [vmem:[%s9 + $0x8] sm:$0xff]
  %v2341 = vld [vmem:[%s9 + $0x10] sm:$0xff]
  %v2342 = vld [vmem:[%s9 + $0x18] sm:$0xff]
  %v2343 = vld [vmem:[%s9 + $0x20] sm:$0xff]
  %v2344 = vld [vmem:[%s9 + $0x28] sm:$0xff]
  %v2345 = vld [vmem:[%s9 + $0x30] sm:$0xff]
  %v2346 = vld [vmem:[%s9 + $0x38] sm:$0xff]
  %v2347 = vld [vmem:[%s9 + $0x40] sm:$0xff]
  %v2348 = vld [vmem:[%s9 + $0x48] sm:$0xff]
  %v2349 = vld [vmem:[%s9 + $0x50] sm:$0xf]
  %v2350 = vld [vmem:[%s10] sm:$0x1]
  %v2352 = vlaneseq
  %v2353 = vshrl.u32 %v2352, 7
  %v2354 = vsub.s32 0, %v2353
  %v2355 = vrot.slane %v2350, %v2354
  %v2358 = vsel %vm625, %v2338, 0
  %v2361 = vsel %vm641, %v2349, 0
  %2363 = vmatprep.subr.mxu0 0.0
  %2364 = vmatpush1.msra.mxu0 %v2339
  %2365 = vmatprep.subr.mxu0 0.0
  %2366 = vmatpush1.msra.mxu0 %v2340
  %2367 = vmatprep.subr.mxu0 0.0
  %2368 = vmatpush1.msra.mxu0 %v2341
  %2369 = vmatprep.subr.mxu0 0.0
  %2370 = vmatpush1.msra.mxu0 %v2342
  %2371 = vmatprep.subr.mxu0 0.0
  %2372 = vmatpush1.msra.mxu0 %v2343
  %2373 = vmatprep.subr.mxu0 0.0
  %2374 = vmatpush1.msra.mxu0 %v2344
  %2375 = vmatprep.subr.mxu0 0.0
  %2376 = vmatpush1.msra.mxu0 %v2345
  %2377 = vmatprep.subr.mxu0 0.0
  %2378 = vmatpush1.msra.mxu0 %v2346
  %2379 = vmatprep.subr.mxu0 0.0
  %2380 = vmatpush1.msra.mxu0 %v2347
  %2381 = vmatprep.subr.mxu0 0.0
  %2382 = vmatpush1.msra.mxu0 %v2348
  %2383 = vmatprep.subr.mxu0 0.0
  %2384 = vmatpush1.msra.mxu0 %v2361
  %2385 = vmatprep.subr.mxu0 0.0
  %2386 = vmatpush1.msra.mxu0 0.0
  %2387 = vmatprep.subr.mxu0 0.0
  %2388 = vmatpush1.msra.mxu0 0.0
  %2389 = vmatprep.subr.mxu0 0.0
  %2390 = vmatpush1.msra.mxu0 0.0
  %2391 = vmatprep.subr.mxu0 0.0
  %2392 = vmatpush1.msra.mxu0 0.0
  %2393 = vmatprep.subr.mxu0 0.0
  %2394 = vmatpush1.msra.mxu0 0.0
  %2395 = vmatprep.subr.mxu0 0.0
  %2396 = vmatpush1.msra.mxu0 0.0
  %2397 = vmatprep.subr.mxu0 0.0
  %2398 = vmatpush1.msra.mxu0 0.0
  %2399 = vmatprep.subr.mxu0 0.0
  %2400 = vmatpush1.msra.mxu0 0.0
  %2401 = vmatprep.subr.mxu0 0.0
  %2402 = vmatpush1.msra.mxu0 0.0
  %2403 = vmatprep.subr.mxu0 0.0
  %2404 = vmatpush1.msra.mxu0 0.0
  %2405 = vmatprep.subr.mxu0 0.0
  %2406 = vmatpush1.msra.mxu0 0.0
  %2407 = vmatprep.subr.mxu0 0.0
  %2408 = vmatpush1.msra.mxu0 0.0
  %2409 = vmatprep.subr.mxu0 0.0
  %2410 = vmatpush1.msra.mxu0 0.0
  %2411 = vmatprep.subr.mxu0 0.0
  %2412 = vmatpush1.msra.mxu0 0.0
  %2413 = vmatprep.subr.mxu0 0.0
  %2414 = vmatpush1.msra.mxu0 0.0
  %2415 = vmatprep.subr.mxu0 0.0
  %2416 = vmatpush1.msra.mxu0 0.0
  %2417 = vmatprep.subr.mxu0 0.0
  %2418 = vmatpush1.msra.mxu0 0.0
  %2419 = vmatprep.subr.mxu0 0.0
  %2420 = vmatpush1.msra.mxu0 0.0
  %2421 = vmatprep.subr.mxu0 0.0
  %2422 = vmatpush1.msra.mxu0 0.0
  %2423 = vmatprep.subr.mxu0 0.0
  %2424 = vmatpush1.msra.mxu0 0.0
  %2425 = vmatprep.subr.mxu0 0.0
  %2426 = vmatpush1.msra.mxu0 0.0
  %2427 = vmatprep.mubr.f32.mxu0 0.0
  %2428 = vmatmul.mubr.f32.gmra.mrb[0].mxu0 %v2358
  %v2429 = vpop.f32.mrb[0].mxu0
  %v2430 = vadd.f32 %v2355, %v2429
  %v2431 = vpop.f32.mrb[0].mxu0
  %2432 = vdwg.mxu0
  %vm2433 = vcmask 220160
  %2434 = vst.msk [vmem:[%s11] sm:$0xff] %vm2433, %v2430
  // Predicated region
  $region46: #{lenet5_forward.1} parent=0 // pred_check
    _
  $region47: #{lenet5_forward.1} parent=0 // pred_check_branch
    %2436 = sbr.rel (0) target = $region49
  $region48: #{lenet5_forward.1} parent=0 // pred_region
    _
  $region49: #{lenet5_forward.1} parent=0 // pred_fallthru
    _
  // Predicated region
  $region50: #{lenet5_forward.1} parent=0 // pred_check
    _
  $region51: #{lenet5_forward.1} parent=0 // pred_check_branch
    %2438 = sbr.rel (0) target = $region53
  $region52: #{lenet5_forward.1} parent=0 // pred_region
    _
  $region53: #{lenet5_forward.1} parent=0 // pred_fallthru
    _

</llo_original>
